<compile_context>
chip_gen: v7x
topology: tpu7x:2x2x1
jax: 0.10.0
libtpu: 0.0.40
codegen_flags: <defaults>
</compile_context>

<pallas_src>
import functools

import jax
import jax.numpy as jnp
from jax import lax
from jax.experimental import pallas as pl
from jax.experimental.pallas import tpu as pltpu

BN_EPS = 1e-5   # cfg.BN.EPS default in pycls
CPAD = 128      # lane-dense channel padding used for the conv weights / output


def _round_up(x, m):
    return ((x + m - 1) // m) * m


def _stem_kernel(xq_ref, w_ref, out_ref, patch_ref, *,
                 TP, ROWS, WO, PW, PW_pad, CIN, t_star, l_star):
    """One (image, pooled-row-tile) grid step."""
    K9 = 9 * CIN
    K = K9 + 1
    n_odd = WO // 2                      # number of valid odd conv columns
    t = pl.program_id(1)
    p0 = t * TP                          # first pooled row of this tile
    dt = patch_ref.dtype

    # One-time hygiene: zero the patch scratch (columns >= PW are never staged).
    @pl.when(jnp.logical_and(pl.program_id(0) == 0, t == 0))
    def _():
        patch_ref[...] = jnp.zeros((ROWS, 2, PW_pad, K), dt)

    # ---- bias feature: an all-ones K-column for valid conv columns ---------
    q_iota = lax.broadcasted_iota(jnp.int32, (PW_pad, 1), 0)
    ok_even = q_iota < PW
    if n_odd < PW:                       # WO odd: last odd conv column invalid
        ones2 = jnp.stack([ok_even, q_iota < n_odd], axis=0)       # (2, PWp, 1)
    else:
        ones2 = jnp.broadcast_to(ok_even[None], (2, PW_pad, 1))
    ones4 = jnp.broadcast_to(ones2[None], (ROWS, 2, PW_pad, 1)).astype(dt)
    patch_ref[:, :, :, K9:K9 + 1] = ones4

    # ---- in-kernel im2col: 18 contiguous-slice copies into the patch -------
    # conv row r = 2*p0 - 1 + l reads padded row 4*p0 + 2*l + kh
    #   -> row parity kh % 2, row index 2*p0 + l + kh // 2
    # conv col c = 2*q + par reads padded col 4*q + (2*par + kw)
    #   -> col residue (2*par + kw) % 4, col index q + (2*par + kw) // 4
    for kh in range(3):
        rp = kh % 2
        rstart = 2 * p0 + (kh // 2)
        for kw in range(3):
            kidx = (kh * 3 + kw) * CIN
            for par in range(2):
                s = 2 * par + kw
                v = xq_ref[0, rp * 4 + (s % 4),
                           pl.ds(rstart, ROWS), (s // 4):(s // 4) + PW, :]
                patch_ref[:, par, 0:PW, kidx:kidx + CIN] = v

    # ---- boundary pool padding: zero invalid conv rows (=> 0 post-ReLU) ----
    # Tile 0 contains conv row -1 (local row 0).
    @pl.when(t == 0)
    def _():
        patch_ref[0:1, :, :, :] = jnp.zeros((1, 2, PW_pad, K), dt)
    # The tile holding the last valid pooled row may consume conv rows >= HO.
    if l_star <= 2 * TP:
        @pl.when(t == t_star)
        def _():
            patch_ref[l_star:ROWS, :, :, :] = jnp.zeros(
                (ROWS - l_star, 2, PW_pad, K), dt)

    # ---- one MXU dot: conv + BN (scale in weights, bias via ones feature) --
    a = patch_ref[...].reshape(ROWS * 2 * PW_pad, K)
    y = jnp.dot(a, w_ref[...], preferred_element_type=jnp.float32)
    y = jnp.maximum(y, 0.0)                                     # ReLU
    y = y.reshape(ROWS, 2, PW_pad, CPAD)

    even = y[:, 0, 0:PW, :]                                     # conv cols 2q
    odd = y[:, 1, 0:PW, :]                                      # conv cols 2q+1

    # ---- max-pool 3x3 stride 2 pad 1: rows then cols, all contiguous -------
    # Row reduction: ROWS = 2*TP + 2 so each 3-row window is contiguous slices.
    e4 = even.reshape(TP + 1, 2, PW, CPAD)
    o4 = odd.reshape(TP + 1, 2, PW, CPAD)
    er = jnp.maximum(jnp.maximum(e4[0:TP, 0], e4[0:TP, 1]), e4[1:TP + 1, 0])
    orr = jnp.maximum(jnp.maximum(o4[0:TP, 0], o4[0:TP, 1]), o4[1:TP + 1, 0])
    if n_odd < PW:   # WO odd: last odd column is pool padding, not real data
        q_mask = lax.broadcasted_iota(jnp.int32, (1, PW, 1), 1) < n_odd
        orr = jnp.where(q_mask, orr, 0.0)
    # Column reduction: pooled col q = max(even[q], odd[q], odd[q-1]).
    out_ref[0, :, 0:1, :] = jnp.maximum(er[:, 0:1], orr[:, 0:1])
    if PW > 1:
        out_ref[0, :, 1:PW, :] = jnp.maximum(
            jnp.maximum(er[:, 1:PW], orr[:, 1:PW]), orr[:, 0:PW - 1])


def shuffle_stem(x_nchw, w_oihw, gamma, beta, run_mean, run_var,
                 eps=BN_EPS, row_tile=8, compute_dtype=jnp.bfloat16):
    """ShuffleStem forward.  x_nchw: (N, Cin, H, W) f32 -> (N, Cout, PH, PW) f32."""
    N, Cin, H, W = x_nchw.shape
    Cout = w_oihw.shape[0]
    assert Cout <= CPAD, "TODO(synk): channel tiling for Cout > 128 not implemented"

    HO = (H - 1) // 2 + 1          # conv output spatial (k=3, s=2, p=1)
    WO = (W - 1) // 2 + 1
    PH = (HO - 1) // 2 + 1         # pool output spatial (k=3, s=2, p=1)
    PW = (WO - 1) // 2 + 1

    TP = min(row_tile, PH)         # pooled rows per grid step (need not divide PH)
    NT = -(-PH // TP)
    PH_pad = NT * TP
    ROWS = 2 * TP + 2              # conv rows computed per grid step
    PW_pad = _round_up(PW, 16)     # sublane-aligned patch width (bf16 tile = 16)

    # Tile holding the last valid pooled row; first local conv row there >= HO.
    t_star = (PH - 1) // TP
    l_star = HO - 2 * t_star * TP + 1

    # ---- NCHW -> NHWC (bf16), zero-pad, split rows by parity / cols mod 4 --
    R_pad = 4 * PH_pad + 6         # 3 zero rows on top, zeros at the bottom
    C_pad = 4 * (PW + 1)           # 1 zero col on the left, zeros on the right
    RH = R_pad // 2
    C4 = PW + 1
    x = jnp.transpose(x_nchw, (0, 2, 3, 1)).astype(compute_dtype)
    xp = jnp.pad(x, ((0, 0), (3, R_pad - 3 - H), (1, C_pad - 1 - W), (0, 0)))
    # xq[n, rp*4 + j, a, m, ci] = padded[n, 2*a + rp, 4*m + j, ci]
    xq = xp.reshape(N, RH, 2, C4, 4, Cin).transpose(0, 2, 4, 1, 3, 5)
    xq = xq.reshape(N, 8, RH, C4, Cin)

    # ---- fold BN into the matmul: scale into weights, bias as an extra row -
    scale = gamma / jnp.sqrt(run_var + eps)
    bias = beta - run_mean * scale
    wt = jnp.transpose(w_oihw, (2, 3, 1, 0)) * scale       # (3, 3, Cin, Cout)
    wt = wt.reshape(9 * Cin, Cout)
    wt = jnp.concatenate([wt, bias[None, :]], axis=0)      # (9*Cin + 1, Cout)
    K = 9 * Cin + 1
    wt = jnp.pad(wt, ((0, 0), (0, CPAD - Cout))).astype(compute_dtype)

    kernel = functools.partial(
        _stem_kernel, TP=TP, ROWS=ROWS, WO=WO, PW=PW, PW_pad=PW_pad,
        CIN=Cin, t_star=t_star, l_star=l_star)

    out = pl.pallas_call(
        kernel,
        out_shape=jax.ShapeDtypeStruct((N, PH_pad, PW, CPAD), jnp.float32),
        grid_spec=pltpu.PrefetchScalarGridSpec(
            num_scalar_prefetch=0,
            grid=(N, NT),
            in_specs=[
                # Whole (small, column-packed) padded image per n; block index
                # is constant across the row-tile axis -> DMA'd once per image.
                pl.BlockSpec((1, 8, RH, C4, Cin), lambda n, t: (n, 0, 0, 0, 0)),
                # TODO(synk): constant operand; pipeline_mode=pl.Buffered(1)
                # would save one (tiny) VMEM buffer.
                pl.BlockSpec((K, CPAD), lambda n, t: (0, 0)),
            ],
            out_specs=pl.BlockSpec((1, TP, PW, CPAD), lambda n, t: (n, t, 0, 0)),
            scratch_shapes=[pltpu.VMEM((ROWS, 2, PW_pad, K), compute_dtype)],
        ),
        compiler_params=pltpu.CompilerParams(
            dimension_semantics=("parallel", "parallel"),
            vmem_limit_bytes=40 * 1024 * 1024),
    )(xq, wt)

    out = out[:, :PH, :, :Cout]              # drop pooled-row / lane padding
    return jnp.transpose(out, (0, 3, 1, 2))  # back to NCHW (module interface)


def _reference(x, w, gamma, beta, mean, var, eps=BN_EPS):
    """Pure-JAX f32 reference of the same forward pass (NCHW)."""
    y = lax.conv_general_dilated(
        x, w, window_strides=(2, 2), padding=((1, 1), (1, 1)),
        dimension_numbers=("NCHW", "OIHW", "NCHW"),
        precision=lax.Precision.HIGHEST)
    inv_std = 1.0 / jnp.sqrt(var + eps)
    s = (gamma * inv_std).reshape(1, -1, 1, 1)
    b = (beta - mean * gamma * inv_std).reshape(1, -1, 1, 1)
    y = jnp.maximum(y * s + b, 0.0)
    y = lax.reduce_window(
        y, -jnp.inf, lax.max,
        window_dimensions=(1, 1, 3, 3), window_strides=(1, 1, 2, 2),
        padding=[(0, 0), (0, 0), (1, 1), (1, 1)])
    return y


if __name__ == "__main__":
    N, C_IN, H, W, C_OUT = 2, 4, 16, 16, 32

    key = jax.random.PRNGKey(0)
    k_x, k_w, k_g, k_b, k_m, k_v = jax.random.split(key, 6)

    x = jax.random.normal(k_x, (N, C_IN, H, W), dtype=jnp.float32)
    conv_w = 0.1 * jax.random.normal(k_w, (C_OUT, C_IN, 3, 3), dtype=jnp.float32)
    gamma = 1.0 + 0.1 * jax.random.normal(k_g, (C_OUT,), dtype=jnp.float32)
    beta = 0.1 * jax.random.normal(k_b, (C_OUT,), dtype=jnp.float32)
    run_mean = 0.1 * jax.random.normal(k_m, (C_OUT,), dtype=jnp.float32)
    run_var = jax.random.uniform(k_v, (C_OUT,), minval=0.5, maxval=1.5,
                                 dtype=jnp.float32)

    # row_tile=2 -> two pooled-row tiles per image (exercises the spatial axis)
    out = shuffle_stem(x, conv_w, gamma, beta, run_mean, run_var, row_tile=2)
    out = jax.block_until_ready(out)

    ref = jax.block_until_ready(
        _reference(x, conv_w, gamma, beta, run_mean, run_var))

    assert out.shape == (N, C_OUT, 4, 4), out.shape
    err = float(jnp.max(jnp.abs(out - ref)))
    # bf16 conv inputs / weights (f32 accumulation) vs the f32 reference
    assert err < 2e-2, err

    print("KERNEL_OK")
</pallas_src>

<mosaic_0001>
module attributes {stable_mosaic.version = 11 : i64} {
  func.func @_stem_kernel(%arg0: i32, %arg1: i32, %arg2: memref<1x8x11x5x4xbf16, #tpu.memory_space<vmem>>, %arg3: memref<37x128xbf16, #tpu.memory_space<vmem>>, %arg4: memref<1x2x4x128xf32, #tpu.memory_space<vmem>>, %arg5: memref<6x2x16x37xbf16, #tpu.memory_space<vmem>>) attributes {dimension_semantics = [#tpu.dimension_semantics<parallel>, #tpu.dimension_semantics<parallel>], iteration_bounds = array<i64: 2, 2>, scalar_prefetch = 0 : i64, scratch_operands = 1 : i64, tpu.core_type = #tpu.core_type<tc>, window_params = [{transform_indices = @transform_0, window_bounds = array<i64: 1, 8, 11, 5, 4>}, {pipeline_mode = #tpu.pipeline_mode<synchronous>, transform_indices = @transform_1, window_bounds = array<i64: 37, 128>}, {transform_indices = @transform_2, window_bounds = array<i64: 1, 2, 4, 128>}]} {
    %c2_i32 = arith.constant 2 : i32
    %0 = arith.muli %arg1, %c2_i32 : i32
    %c0_i32 = arith.constant 0 : i32
    %1 = arith.cmpi eq, %arg0, %c0_i32 : i32
    %c0_i32_0 = arith.constant 0 : i32
    %2 = arith.cmpi eq, %arg1, %c0_i32_0 : i32
    %3 = arith.andi %1, %2 : i1
    %4 = arith.extui %3 : i1 to i32
    %c0_i32_1 = arith.constant 0 : i32
    %5 = arith.cmpi ne, %4, %c0_i32_1 : i32
    scf.if %5 {
      %cst_156 = arith.constant 0.000000e+00 : bf16
      %179 = vector.broadcast %cst_156 : bf16 to vector<6x2x16x37xbf16>
      %c0_157 = arith.constant 0 : index
      %c0_158 = arith.constant 0 : index
      %c0_159 = arith.constant 0 : index
      %c0_160 = arith.constant 0 : index
      %180 = vector.load %arg5[%c0_157, %c0_158, %c0_159, %c0_160] : memref<6x2x16x37xbf16, #tpu.memory_space<vmem>>, vector<6x2x16x37xbf16>
      tpu.vector_store %arg5[%c0_157, %c0_158, %c0_159, %c0_160], %179 {strides = array<i32>} : memref<6x2x16x37xbf16, #tpu.memory_space<vmem>>, vector<6x2x16x37xbf16>,
    } else {
    }
    %6 = tpu.iota {dimensions = array<i32: 0>} : vector<16x1xi32>
    %c4_i32 = arith.constant 4 : i32
    %7 = vector.broadcast %c4_i32 : i32 to vector<16x1xi32>
    %8 = arith.cmpi slt, %6, %7 : vector<16x1xi32>
    %9 = vector.shape_cast %8 : vector<16x1xi1> to vector<1x16x1xi1>
    %10 = vector.shape_cast %9 : vector<1x16x1xi1> to vector<1x16x1xi1>
    %11 = vector.broadcast %10 : vector<1x16x1xi1> to vector<2x16x1xi1>
    %12 = vector.shape_cast %11 : vector<2x16x1xi1> to vector<1x2x16x1xi1>
    %13 = vector.shape_cast %12 : vector<1x2x16x1xi1> to vector<1x2x16x1xi1>
    %14 = vector.broadcast %13 : vector<1x2x16x1xi1> to vector<6x2x16x1xi1>
    %15 = arith.extui %14 : vector<6x2x16x1xi1> to vector<6x2x16x1xi32>
    %16 = arith.sitofp %15 : vector<6x2x16x1xi32> to vector<6x2x16x1xf32>
    %17 = arith.truncf %16 : vector<6x2x16x1xf32> to vector<6x2x16x1xbf16>
    %c0 = arith.constant 0 : index
    %c0_2 = arith.constant 0 : index
    %c0_3 = arith.constant 0 : index
    %c36 = arith.constant 36 : index
    %18 = vector.load %arg5[%c0, %c0_2, %c0_3, %c36] : memref<6x2x16x37xbf16, #tpu.memory_space<vmem>>, vector<6x2x16x1xbf16>
    tpu.vector_store %arg5[%c0, %c0_2, %c0_3, %c36], %17 {strides = array<i32>} : memref<6x2x16x37xbf16, #tpu.memory_space<vmem>>, vector<6x2x16x1xbf16>,
    %c2_i32_4 = arith.constant 2 : i32
    %19 = arith.muli %c2_i32_4, %0 : i32
    %c0_i32_5 = arith.constant 0 : i32
    %20 = arith.addi %19, %c0_i32_5 : i32
    %c0_6 = arith.constant 0 : index
    %c0_7 = arith.constant 0 : index
    %21 = arith.index_cast %20 : i32 to index
    %c0_8 = arith.constant 0 : index
    %c0_9 = arith.constant 0 : index
    %22 = vector.load %arg2[%c0_6, %c0_7, %21, %c0_8, %c0_9] : memref<1x8x11x5x4xbf16, #tpu.memory_space<vmem>>, vector<1x1x6x4x4xbf16>
    %23 = vector.shape_cast %22 : vector<1x1x6x4x4xbf16> to vector<6x4x4xbf16>
    %c0_10 = arith.constant 0 : index
    %c0_11 = arith.constant 0 : index
    %c0_12 = arith.constant 0 : index
    %c0_13 = arith.constant 0 : index
    %24 = vector.load %arg5[%c0_10, %c0_11, %c0_12, %c0_13] : memref<6x2x16x37xbf16, #tpu.memory_space<vmem>>, vector<6x1x4x4xbf16>
    %25 = vector.shape_cast %24 : vector<6x1x4x4xbf16> to vector<6x4x4xbf16>
    %26 = vector.shape_cast %23 : vector<6x4x4xbf16> to vector<6x1x4x4xbf16>
    tpu.vector_store %arg5[%c0_10, %c0_11, %c0_12, %c0_13], %26 {strides = array<i32>} : memref<6x2x16x37xbf16, #tpu.memory_space<vmem>>, vector<6x1x4x4xbf16>,
    %c0_14 = arith.constant 0 : index
    %c2 = arith.constant 2 : index
    %27 = arith.index_cast %20 : i32 to index
    %c0_15 = arith.constant 0 : index
    %c0_16 = arith.constant 0 : index
    %28 = vector.load %arg2[%c0_14, %c2, %27, %c0_15, %c0_16] : memref<1x8x11x5x4xbf16, #tpu.memory_space<vmem>>, vector<1x1x6x4x4xbf16>
    %29 = vector.shape_cast %28 : vector<1x1x6x4x4xbf16> to vector<6x4x4xbf16>
    %c0_17 = arith.constant 0 : index
    %c1 = arith.constant 1 : index
    %c0_18 = arith.constant 0 : index
    %c0_19 = arith.constant 0 : index
    %30 = vector.load %arg5[%c0_17, %c1, %c0_18, %c0_19] : memref<6x2x16x37xbf16, #tpu.memory_space<vmem>>, vector<6x1x4x4xbf16>
    %31 = vector.shape_cast %30 : vector<6x1x4x4xbf16> to vector<6x4x4xbf16>
    %32 = vector.shape_cast %29 : vector<6x4x4xbf16> to vector<6x1x4x4xbf16>
    tpu.vector_store %arg5[%c0_17, %c1, %c0_18, %c0_19], %32 {strides = array<i32>} : memref<6x2x16x37xbf16, #tpu.memory_space<vmem>>, vector<6x1x4x4xbf16>,
    %c0_20 = arith.constant 0 : index
    %c1_21 = arith.constant 1 : index
    %33 = arith.index_cast %20 : i32 to index
    %c0_22 = arith.constant 0 : index
    %c0_23 = arith.constant 0 : index
    %34 = vector.load %arg2[%c0_20, %c1_21, %33, %c0_22, %c0_23] : memref<1x8x11x5x4xbf16, #tpu.memory_space<vmem>>, vector<1x1x6x4x4xbf16>
    %35 = vector.shape_cast %34 : vector<1x1x6x4x4xbf16> to vector<6x4x4xbf16>
    %c0_24 = arith.constant 0 : index
    %c0_25 = arith.constant 0 : index
    %c0_26 = arith.constant 0 : index
    %c4 = arith.constant 4 : index
    %36 = vector.load %arg5[%c0_24, %c0_25, %c0_26, %c4] : memref<6x2x16x37xbf16, #tpu.memory_space<vmem>>, vector<6x1x4x4xbf16>
    %37 = vector.shape_cast %36 : vector<6x1x4x4xbf16> to vector<6x4x4xbf16>
    %38 = vector.shape_cast %35 : vector<6x4x4xbf16> to vector<6x1x4x4xbf16>
    tpu.vector_store %arg5[%c0_24, %c0_25, %c0_26, %c4], %38 {strides = array<i32>} : memref<6x2x16x37xbf16, #tpu.memory_space<vmem>>, vector<6x1x4x4xbf16>,
    %c0_27 = arith.constant 0 : index
    %c3 = arith.constant 3 : index
    %39 = arith.index_cast %20 : i32 to index
    %c0_28 = arith.constant 0 : index
    %c0_29 = arith.constant 0 : index
    %40 = vector.load %arg2[%c0_27, %c3, %39, %c0_28, %c0_29] : memref<1x8x11x5x4xbf16, #tpu.memory_space<vmem>>, vector<1x1x6x4x4xbf16>
    %41 = vector.shape_cast %40 : vector<1x1x6x4x4xbf16> to vector<6x4x4xbf16>
    %c0_30 = arith.constant 0 : index
    %c1_31 = arith.constant 1 : index
    %c0_32 = arith.constant 0 : index
    %c4_33 = arith.constant 4 : index
    %42 = vector.load %arg5[%c0_30, %c1_31, %c0_32, %c4_33] : memref<6x2x16x37xbf16, #tpu.memory_space<vmem>>, vector<6x1x4x4xbf16>
    %43 = vector.shape_cast %42 : vector<6x1x4x4xbf16> to vector<6x4x4xbf16>
    %44 = vector.shape_cast %41 : vector<6x4x4xbf16> to vector<6x1x4x4xbf16>
    tpu.vector_store %arg5[%c0_30, %c1_31, %c0_32, %c4_33], %44 {strides = array<i32>} : memref<6x2x16x37xbf16, #tpu.memory_space<vmem>>, vector<6x1x4x4xbf16>,
    %c0_34 = arith.constant 0 : index
    %c2_35 = arith.constant 2 : index
    %45 = arith.index_cast %20 : i32 to index
    %c0_36 = arith.constant 0 : index
    %c0_37 = arith.constant 0 : index
    %46 = vector.load %arg2[%c0_34, %c2_35, %45, %c0_36, %c0_37] : memref<1x8x11x5x4xbf16, #tpu.memory_space<vmem>>, vector<1x1x6x4x4xbf16>
    %47 = vector.shape_cast %46 : vector<1x1x6x4x4xbf16> to vector<6x4x4xbf16>
    %c0_38 = arith.constant 0 : index
    %c0_39 = arith.constant 0 : index
    %c0_40 = arith.constant 0 : index
    %c8 = arith.constant 8 : index
    %48 = vector.load %arg5[%c0_38, %c0_39, %c0_40, %c8] : memref<6x2x16x37xbf16, #tpu.memory_space<vmem>>, vector<6x1x4x4xbf16>
    %49 = vector.shape_cast %48 : vector<6x1x4x4xbf16> to vector<6x4x4xbf16>
    %50 = vector.shape_cast %47 : vector<6x4x4xbf16> to vector<6x1x4x4xbf16>
    tpu.vector_store %arg5[%c0_38, %c0_39, %c0_40, %c8], %50 {strides = array<i32>} : memref<6x2x16x37xbf16, #tpu.memory_space<vmem>>, vector<6x1x4x4xbf16>,
    %c0_41 = arith.constant 0 : index
    %c0_42 = arith.constant 0 : index
    %51 = arith.index_cast %20 : i32 to index
    %c1_43 = arith.constant 1 : index
    %c0_44 = arith.constant 0 : index
    %52 = vector.load %arg2[%c0_41, %c0_42, %51, %c1_43, %c0_44] : memref<1x8x11x5x4xbf16, #tpu.memory_space<vmem>>, vector<1x1x6x4x4xbf16>
    %53 = vector.shape_cast %52 : vector<1x1x6x4x4xbf16> to vector<6x4x4xbf16>
    %c0_45 = arith.constant 0 : index
    %c1_46 = arith.constant 1 : index
    %c0_47 = arith.constant 0 : index
    %c8_48 = arith.constant 8 : index
    %54 = vector.load %arg5[%c0_45, %c1_46, %c0_47, %c8_48] : memref<6x2x16x37xbf16, #tpu.memory_space<vmem>>, vector<6x1x4x4xbf16>
    %55 = vector.shape_cast %54 : vector<6x1x4x4xbf16> to vector<6x4x4xbf16>
    %56 = vector.shape_cast %53 : vector<6x4x4xbf16> to vector<6x1x4x4xbf16>
    tpu.vector_store %arg5[%c0_45, %c1_46, %c0_47, %c8_48], %56 {strides = array<i32>} : memref<6x2x16x37xbf16, #tpu.memory_space<vmem>>, vector<6x1x4x4xbf16>,
    %c2_i32_49 = arith.constant 2 : i32
    %57 = arith.muli %c2_i32_49, %0 : i32
    %c0_i32_50 = arith.constant 0 : i32
    %58 = arith.addi %57, %c0_i32_50 : i32
    %c0_51 = arith.constant 0 : index
    %c4_52 = arith.constant 4 : index
    %59 = arith.index_cast %58 : i32 to index
    %c0_53 = arith.constant 0 : index
    %c0_54 = arith.constant 0 : index
    %60 = vector.load %arg2[%c0_51, %c4_52, %59, %c0_53, %c0_54] : memref<1x8x11x5x4xbf16, #tpu.memory_space<vmem>>, vector<1x1x6x4x4xbf16>
    %61 = vector.shape_cast %60 : vector<1x1x6x4x4xbf16> to vector<6x4x4xbf16>
    %c0_55 = arith.constant 0 : index
    %c0_56 = arith.constant 0 : index
    %c0_57 = arith.constant 0 : index
    %c12 = arith.constant 12 : index
    %62 = vector.load %arg5[%c0_55, %c0_56, %c0_57, %c12] : memref<6x2x16x37xbf16, #tpu.memory_space<vmem>>, vector<6x1x4x4xbf16>
    %63 = vector.shape_cast %62 : vector<6x1x4x4xbf16> to vector<6x4x4xbf16>
    %64 = vector.shape_cast %61 : vector<6x4x4xbf16> to vector<6x1x4x4xbf16>
    tpu.vector_store %arg5[%c0_55, %c0_56, %c0_57, %c12], %64 {strides = array<i32>} : memref<6x2x16x37xbf16, #tpu.memory_space<vmem>>, vector<6x1x4x4xbf16>,
    %c0_58 = arith.constant 0 : index
    %c6 = arith.constant 6 : index
    %65 = arith.index_cast %58 : i32 to index
    %c0_59 = arith.constant 0 : index
    %c0_60 = arith.constant 0 : index
    %66 = vector.load %arg2[%c0_58, %c6, %65, %c0_59, %c0_60] : memref<1x8x11x5x4xbf16, #tpu.memory_space<vmem>>, vector<1x1x6x4x4xbf16>
    %67 = vector.shape_cast %66 : vector<1x1x6x4x4xbf16> to vector<6x4x4xbf16>
    %c0_61 = arith.constant 0 : index
    %c1_62 = arith.constant 1 : index
    %c0_63 = arith.constant 0 : index
    %c12_64 = arith.constant 12 : index
    %68 = vector.load %arg5[%c0_61, %c1_62, %c0_63, %c12_64] : memref<6x2x16x37xbf16, #tpu.memory_space<vmem>>, vector<6x1x4x4xbf16>
    %69 = vector.shape_cast %68 : vector<6x1x4x4xbf16> to vector<6x4x4xbf16>
    %70 = vector.shape_cast %67 : vector<6x4x4xbf16> to vector<6x1x4x4xbf16>
    tpu.vector_store %arg5[%c0_61, %c1_62, %c0_63, %c12_64], %70 {strides = array<i32>} : memref<6x2x16x37xbf16, #tpu.memory_space<vmem>>, vector<6x1x4x4xbf16>,
    %c0_65 = arith.constant 0 : index
    %c5 = arith.constant 5 : index
    %71 = arith.index_cast %58 : i32 to index
    %c0_66 = arith.constant 0 : index
    %c0_67 = arith.constant 0 : index
    %72 = vector.load %arg2[%c0_65, %c5, %71, %c0_66, %c0_67] : memref<1x8x11x5x4xbf16, #tpu.memory_space<vmem>>, vector<1x1x6x4x4xbf16>
    %73 = vector.shape_cast %72 : vector<1x1x6x4x4xbf16> to vector<6x4x4xbf16>
    %c0_68 = arith.constant 0 : index
    %c0_69 = arith.constant 0 : index
    %c0_70 = arith.constant 0 : index
    %c16 = arith.constant 16 : index
    %74 = vector.load %arg5[%c0_68, %c0_69, %c0_70, %c16] : memref<6x2x16x37xbf16, #tpu.memory_space<vmem>>, vector<6x1x4x4xbf16>
    %75 = vector.shape_cast %74 : vector<6x1x4x4xbf16> to vector<6x4x4xbf16>
    %76 = vector.shape_cast %73 : vector<6x4x4xbf16> to vector<6x1x4x4xbf16>
    tpu.vector_store %arg5[%c0_68, %c0_69, %c0_70, %c16], %76 {strides = array<i32>} : memref<6x2x16x37xbf16, #tpu.memory_space<vmem>>, vector<6x1x4x4xbf16>,
    %c0_71 = arith.constant 0 : index
    %c7 = arith.constant 7 : index
    %77 = arith.index_cast %58 : i32 to index
    %c0_72 = arith.constant 0 : index
    %c0_73 = arith.constant 0 : index
    %78 = vector.load %arg2[%c0_71, %c7, %77, %c0_72, %c0_73] : memref<1x8x11x5x4xbf16, #tpu.memory_space<vmem>>, vector<1x1x6x4x4xbf16>
    %79 = vector.shape_cast %78 : vector<1x1x6x4x4xbf16> to vector<6x4x4xbf16>
    %c0_74 = arith.constant 0 : index
    %c1_75 = arith.constant 1 : index
    %c0_76 = arith.constant 0 : index
    %c16_77 = arith.constant 16 : index
    %80 = vector.load %arg5[%c0_74, %c1_75, %c0_76, %c16_77] : memref<6x2x16x37xbf16, #tpu.memory_space<vmem>>, vector<6x1x4x4xbf16>
    %81 = vector.shape_cast %80 : vector<6x1x4x4xbf16> to vector<6x4x4xbf16>
    %82 = vector.shape_cast %79 : vector<6x4x4xbf16> to vector<6x1x4x4xbf16>
    tpu.vector_store %arg5[%c0_74, %c1_75, %c0_76, %c16_77], %82 {strides = array<i32>} : memref<6x2x16x37xbf16, #tpu.memory_space<vmem>>, vector<6x1x4x4xbf16>,
    %c0_78 = arith.constant 0 : index
    %c6_79 = arith.constant 6 : index
    %83 = arith.index_cast %58 : i32 to index
    %c0_80 = arith.constant 0 : index
    %c0_81 = arith.constant 0 : index
    %84 = vector.load %arg2[%c0_78, %c6_79, %83, %c0_80, %c0_81] : memref<1x8x11x5x4xbf16, #tpu.memory_space<vmem>>, vector<1x1x6x4x4xbf16>
    %85 = vector.shape_cast %84 : vector<1x1x6x4x4xbf16> to vector<6x4x4xbf16>
    %c0_82 = arith.constant 0 : index
    %c0_83 = arith.constant 0 : index
    %c0_84 = arith.constant 0 : index
    %c20 = arith.constant 20 : index
    %86 = vector.load %arg5[%c0_82, %c0_83, %c0_84, %c20] : memref<6x2x16x37xbf16, #tpu.memory_space<vmem>>, vector<6x1x4x4xbf16>
    %87 = vector.shape_cast %86 : vector<6x1x4x4xbf16> to vector<6x4x4xbf16>
    %88 = vector.shape_cast %85 : vector<6x4x4xbf16> to vector<6x1x4x4xbf16>
    tpu.vector_store %arg5[%c0_82, %c0_83, %c0_84, %c20], %88 {strides = array<i32>} : memref<6x2x16x37xbf16, #tpu.memory_space<vmem>>, vector<6x1x4x4xbf16>,
    %c0_85 = arith.constant 0 : index
    %c4_86 = arith.constant 4 : index
    %89 = arith.index_cast %58 : i32 to index
    %c1_87 = arith.constant 1 : index
    %c0_88 = arith.constant 0 : index
    %90 = vector.load %arg2[%c0_85, %c4_86, %89, %c1_87, %c0_88] : memref<1x8x11x5x4xbf16, #tpu.memory_space<vmem>>, vector<1x1x6x4x4xbf16>
    %91 = vector.shape_cast %90 : vector<1x1x6x4x4xbf16> to vector<6x4x4xbf16>
    %c0_89 = arith.constant 0 : index
    %c1_90 = arith.constant 1 : index
    %c0_91 = arith.constant 0 : index
    %c20_92 = arith.constant 20 : index
    %92 = vector.load %arg5[%c0_89, %c1_90, %c0_91, %c20_92] : memref<6x2x16x37xbf16, #tpu.memory_space<vmem>>, vector<6x1x4x4xbf16>
    %93 = vector.shape_cast %92 : vector<6x1x4x4xbf16> to vector<6x4x4xbf16>
    %94 = vector.shape_cast %91 : vector<6x4x4xbf16> to vector<6x1x4x4xbf16>
    tpu.vector_store %arg5[%c0_89, %c1_90, %c0_91, %c20_92], %94 {strides = array<i32>} : memref<6x2x16x37xbf16, #tpu.memory_space<vmem>>, vector<6x1x4x4xbf16>,
    %c2_i32_93 = arith.constant 2 : i32
    %95 = arith.muli %c2_i32_93, %0 : i32
    %c1_i32 = arith.constant 1 : i32
    %96 = arith.addi %95, %c1_i32 : i32
    %c0_94 = arith.constant 0 : index
    %c0_95 = arith.constant 0 : index
    %97 = arith.index_cast %96 : i32 to index
    %c0_96 = arith.constant 0 : index
    %c0_97 = arith.constant 0 : index
    %98 = vector.load %arg2[%c0_94, %c0_95, %97, %c0_96, %c0_97] : memref<1x8x11x5x4xbf16, #tpu.memory_space<vmem>>, vector<1x1x6x4x4xbf16>
    %99 = vector.shape_cast %98 : vector<1x1x6x4x4xbf16> to vector<6x4x4xbf16>
    %c0_98 = arith.constant 0 : index
    %c0_99 = arith.constant 0 : index
    %c0_100 = arith.constant 0 : index
    %c24 = arith.constant 24 : index
    %100 = vector.load %arg5[%c0_98, %c0_99, %c0_100, %c24] : memref<6x2x16x37xbf16, #tpu.memory_space<vmem>>, vector<6x1x4x4xbf16>
    %101 = vector.shape_cast %100 : vector<6x1x4x4xbf16> to vector<6x4x4xbf16>
    %102 = vector.shape_cast %99 : vector<6x4x4xbf16> to vector<6x1x4x4xbf16>
    tpu.vector_store %arg5[%c0_98, %c0_99, %c0_100, %c24], %102 {strides = array<i32>} : memref<6x2x16x37xbf16, #tpu.memory_space<vmem>>, vector<6x1x4x4xbf16>,
    %c0_101 = arith.constant 0 : index
    %c2_102 = arith.constant 2 : index
    %103 = arith.index_cast %96 : i32 to index
    %c0_103 = arith.constant 0 : index
    %c0_104 = arith.constant 0 : index
    %104 = vector.load %arg2[%c0_101, %c2_102, %103, %c0_103, %c0_104] : memref<1x8x11x5x4xbf16, #tpu.memory_space<vmem>>, vector<1x1x6x4x4xbf16>
    %105 = vector.shape_cast %104 : vector<1x1x6x4x4xbf16> to vector<6x4x4xbf16>
    %c0_105 = arith.constant 0 : index
    %c1_106 = arith.constant 1 : index
    %c0_107 = arith.constant 0 : index
    %c24_108 = arith.constant 24 : index
    %106 = vector.load %arg5[%c0_105, %c1_106, %c0_107, %c24_108] : memref<6x2x16x37xbf16, #tpu.memory_space<vmem>>, vector<6x1x4x4xbf16>
    %107 = vector.shape_cast %106 : vector<6x1x4x4xbf16> to vector<6x4x4xbf16>
    %108 = vector.shape_cast %105 : vector<6x4x4xbf16> to vector<6x1x4x4xbf16>
    tpu.vector_store %arg5[%c0_105, %c1_106, %c0_107, %c24_108], %108 {strides = array<i32>} : memref<6x2x16x37xbf16, #tpu.memory_space<vmem>>, vector<6x1x4x4xbf16>,
    %c0_109 = arith.constant 0 : index
    %c1_110 = arith.constant 1 : index
    %109 = arith.index_cast %96 : i32 to index
    %c0_111 = arith.constant 0 : index
    %c0_112 = arith.constant 0 : index
    %110 = vector.load %arg2[%c0_109, %c1_110, %109, %c0_111, %c0_112] : memref<1x8x11x5x4xbf16, #tpu.memory_space<vmem>>, vector<1x1x6x4x4xbf16>
    %111 = vector.shape_cast %110 : vector<1x1x6x4x4xbf16> to vector<6x4x4xbf16>
    %c0_113 = arith.constant 0 : index
    %c0_114 = arith.constant 0 : index
    %c0_115 = arith.constant 0 : index
    %c28 = arith.constant 28 : index
    %112 = vector.load %arg5[%c0_113, %c0_114, %c0_115, %c28] : memref<6x2x16x37xbf16, #tpu.memory_space<vmem>>, vector<6x1x4x4xbf16>
    %113 = vector.shape_cast %112 : vector<6x1x4x4xbf16> to vector<6x4x4xbf16>
    %114 = vector.shape_cast %111 : vector<6x4x4xbf16> to vector<6x1x4x4xbf16>
    tpu.vector_store %arg5[%c0_113, %c0_114, %c0_115, %c28], %114 {strides = array<i32>} : memref<6x2x16x37xbf16, #tpu.memory_space<vmem>>, vector<6x1x4x4xbf16>,
    %c0_116 = arith.constant 0 : index
    %c3_117 = arith.constant 3 : index
    %115 = arith.index_cast %96 : i32 to index
    %c0_118 = arith.constant 0 : index
    %c0_119 = arith.constant 0 : index
    %116 = vector.load %arg2[%c0_116, %c3_117, %115, %c0_118, %c0_119] : memref<1x8x11x5x4xbf16, #tpu.memory_space<vmem>>, vector<1x1x6x4x4xbf16>
    %117 = vector.shape_cast %116 : vector<1x1x6x4x4xbf16> to vector<6x4x4xbf16>
    %c0_120 = arith.constant 0 : index
    %c1_121 = arith.constant 1 : index
    %c0_122 = arith.constant 0 : index
    %c28_123 = arith.constant 28 : index
    %118 = vector.load %arg5[%c0_120, %c1_121, %c0_122, %c28_123] : memref<6x2x16x37xbf16, #tpu.memory_space<vmem>>, vector<6x1x4x4xbf16>
    %119 = vector.shape_cast %118 : vector<6x1x4x4xbf16> to vector<6x4x4xbf16>
    %120 = vector.shape_cast %117 : vector<6x4x4xbf16> to vector<6x1x4x4xbf16>
    tpu.vector_store %arg5[%c0_120, %c1_121, %c0_122, %c28_123], %120 {strides = array<i32>} : memref<6x2x16x37xbf16, #tpu.memory_space<vmem>>, vector<6x1x4x4xbf16>,
    %c0_124 = arith.constant 0 : index
    %c2_125 = arith.constant 2 : index
    %121 = arith.index_cast %96 : i32 to index
    %c0_126 = arith.constant 0 : index
    %c0_127 = arith.constant 0 : index
    %122 = vector.load %arg2[%c0_124, %c2_125, %121, %c0_126, %c0_127] : memref<1x8x11x5x4xbf16, #tpu.memory_space<vmem>>, vector<1x1x6x4x4xbf16>
    %123 = vector.shape_cast %122 : vector<1x1x6x4x4xbf16> to vector<6x4x4xbf16>
    %c0_128 = arith.constant 0 : index
    %c0_129 = arith.constant 0 : index
    %c0_130 = arith.constant 0 : index
    %c32 = arith.constant 32 : index
    %124 = vector.load %arg5[%c0_128, %c0_129, %c0_130, %c32] : memref<6x2x16x37xbf16, #tpu.memory_space<vmem>>, vector<6x1x4x4xbf16>
    %125 = vector.shape_cast %124 : vector<6x1x4x4xbf16> to vector<6x4x4xbf16>
    %126 = vector.shape_cast %123 : vector<6x4x4xbf16> to vector<6x1x4x4xbf16>
    tpu.vector_store %arg5[%c0_128, %c0_129, %c0_130, %c32], %126 {strides = array<i32>} : memref<6x2x16x37xbf16, #tpu.memory_space<vmem>>, vector<6x1x4x4xbf16>,
    %c0_131 = arith.constant 0 : index
    %c0_132 = arith.constant 0 : index
    %127 = arith.index_cast %96 : i32 to index
    %c1_133 = arith.constant 1 : index
    %c0_134 = arith.constant 0 : index
    %128 = vector.load %arg2[%c0_131, %c0_132, %127, %c1_133, %c0_134] : memref<1x8x11x5x4xbf16, #tpu.memory_space<vmem>>, vector<1x1x6x4x4xbf16>
    %129 = vector.shape_cast %128 : vector<1x1x6x4x4xbf16> to vector<6x4x4xbf16>
    %c0_135 = arith.constant 0 : index
    %c1_136 = arith.constant 1 : index
    %c0_137 = arith.constant 0 : index
    %c32_138 = arith.constant 32 : index
    %130 = vector.load %arg5[%c0_135, %c1_136, %c0_137, %c32_138] : memref<6x2x16x37xbf16, #tpu.memory_space<vmem>>, vector<6x1x4x4xbf16>
    %131 = vector.shape_cast %130 : vector<6x1x4x4xbf16> to vector<6x4x4xbf16>
    %132 = vector.shape_cast %129 : vector<6x4x4xbf16> to vector<6x1x4x4xbf16>
    tpu.vector_store %arg5[%c0_135, %c1_136, %c0_137, %c32_138], %132 {strides = array<i32>} : memref<6x2x16x37xbf16, #tpu.memory_space<vmem>>, vector<6x1x4x4xbf16>,
    %c0_i32_139 = arith.constant 0 : i32
    %133 = arith.cmpi eq, %arg1, %c0_i32_139 : i32
    %134 = arith.extui %133 : i1 to i32
    %c0_i32_140 = arith.constant 0 : i32
    %135 = arith.cmpi ne, %134, %c0_i32_140 : i32
    scf.if %135 {
      %cst_156 = arith.constant 0.000000e+00 : bf16
      %179 = vector.broadcast %cst_156 : bf16 to vector<1x2x16x37xbf16>
      %c0_157 = arith.constant 0 : index
      %c0_158 = arith.constant 0 : index
      %c0_159 = arith.constant 0 : index
      %c0_160 = arith.constant 0 : index
      %180 = vector.load %arg5[%c0_157, %c0_158, %c0_159, %c0_160] : memref<6x2x16x37xbf16, #tpu.memory_space<vmem>>, vector<1x2x16x37xbf16>
      tpu.vector_store %arg5[%c0_157, %c0_158, %c0_159, %c0_160], %179 {strides = array<i32>} : memref<6x2x16x37xbf16, #tpu.memory_space<vmem>>, vector<1x2x16x37xbf16>,
    } else {
    }
    %c0_141 = arith.constant 0 : index
    %c0_142 = arith.constant 0 : index
    %c0_143 = arith.constant 0 : index
    %c0_144 = arith.constant 0 : index
    %136 = vector.load %arg5[%c0_141, %c0_142, %c0_143, %c0_144] : memref<6x2x16x37xbf16, #tpu.memory_space<vmem>>, vector<6x2x16x37xbf16>
    %137 = vector.shape_cast %136 : vector<6x2x16x37xbf16> to vector<192x37xbf16>
    %c0_145 = arith.constant 0 : index
    %c0_146 = arith.constant 0 : index
    %138 = vector.load %arg3[%c0_145, %c0_146] : memref<37x128xbf16, #tpu.memory_space<vmem>>, vector<37x128xbf16>
    %cst = arith.constant dense<0.000000e+00> : vector<192x128xf32>
    %139 = tpu.matmul %137, %138, %cst {dimension_numbers = #tpu.dot_dimension_numbers<[1], [0], [0], [1], [0, 0, 1, 1], [], []>} : vector<192x37xbf16>, vector<37x128xbf16>, vector<192x128xf32> -> vector<192x128xf32>
    %cst_147 = arith.constant 0.000000e+00 : f32
    %140 = vector.broadcast %cst_147 : f32 to vector<192x128xf32>
    %141 = arith.maximumf %139, %140 : vector<192x128xf32>
    %142 = vector.shape_cast %141 : vector<192x128xf32> to vector<6x2x16x128xf32>
    %143 = vector.extract_strided_slice %142 {offsets = [0, 0, 0, 0], sizes = [6, 1, 4, 128], strides = [1, 1, 1, 1]} : vector<6x2x16x128xf32> to vector<6x1x4x128xf32>
    %144 = vector.shape_cast %143 : vector<6x1x4x128xf32> to vector<6x4x128xf32>
    %145 = vector.extract_strided_slice %142 {offsets = [0, 1, 0, 0], sizes = [6, 1, 4, 128], strides = [1, 1, 1, 1]} : vector<6x2x16x128xf32> to vector<6x1x4x128xf32>
    %146 = vector.shape_cast %145 : vector<6x1x4x128xf32> to vector<6x4x128xf32>
    %147 = vector.shape_cast %144 : vector<6x4x128xf32> to vector<3x2x4x128xf32>
    %148 = vector.shape_cast %146 : vector<6x4x128xf32> to vector<3x2x4x128xf32>
    %149 = vector.extract_strided_slice %147 {offsets = [0, 0, 0, 0], sizes = [2, 1, 4, 128], strides = [1, 1, 1, 1]} : vector<3x2x4x128xf32> to vector<2x1x4x128xf32>
    %150 = vector.shape_cast %149 : vector<2x1x4x128xf32> to vector<2x4x128xf32>
    %151 = vector.extract_strided_slice %147 {offsets = [0, 1, 0, 0], sizes = [2, 1, 4, 128], strides = [1, 1, 1, 1]} : vector<3x2x4x128xf32> to vector<2x1x4x128xf32>
    %152 = vector.shape_cast %151 : vector<2x1x4x128xf32> to vector<2x4x128xf32>
    %153 = arith.maximumf %150, %152 : vector<2x4x128xf32>
    %154 = vector.extract_strided_slice %147 {offsets = [1, 0, 0, 0], sizes = [2, 1, 4, 128], strides = [1, 1, 1, 1]} : vector<3x2x4x128xf32> to vector<2x1x4x128xf32>
    %155 = vector.shape_cast %154 : vector<2x1x4x128xf32> to vector<2x4x128xf32>
    %156 = arith.maximumf %153, %155 : vector<2x4x128xf32>
    %157 = vector.extract_strided_slice %148 {offsets = [0, 0, 0, 0], sizes = [2, 1, 4, 128], strides = [1, 1, 1, 1]} : vector<3x2x4x128xf32> to vector<2x1x4x128xf32>
    %158 = vector.shape_cast %157 : vector<2x1x4x128xf32> to vector<2x4x128xf32>
    %159 = vector.extract_strided_slice %148 {offsets = [0, 1, 0, 0], sizes = [2, 1, 4, 128], strides = [1, 1, 1, 1]} : vector<3x2x4x128xf32> to vector<2x1x4x128xf32>
    %160 = vector.shape_cast %159 : vector<2x1x4x128xf32> to vector<2x4x128xf32>
    %161 = arith.maximumf %158, %160 : vector<2x4x128xf32>
    %162 = vector.extract_strided_slice %148 {offsets = [1, 0, 0, 0], sizes = [2, 1, 4, 128], strides = [1, 1, 1, 1]} : vector<3x2x4x128xf32> to vector<2x1x4x128xf32>
    %163 = vector.shape_cast %162 : vector<2x1x4x128xf32> to vector<2x4x128xf32>
    %164 = arith.maximumf %161, %163 : vector<2x4x128xf32>
    %165 = vector.extract_strided_slice %156 {offsets = [0, 0, 0], sizes = [2, 1, 128], strides = [1, 1, 1]} : vector<2x4x128xf32> to vector<2x1x128xf32>
    %166 = vector.extract_strided_slice %164 {offsets = [0, 0, 0], sizes = [2, 1, 128], strides = [1, 1, 1]} : vector<2x4x128xf32> to vector<2x1x128xf32>
    %167 = arith.maximumf %165, %166 : vector<2x1x128xf32>
    %c0_148 = arith.constant 0 : index
    %c0_149 = arith.constant 0 : index
    %c0_150 = arith.constant 0 : index
    %c0_151 = arith.constant 0 : index
    %168 = vector.load %arg4[%c0_148, %c0_149, %c0_150, %c0_151] : memref<1x2x4x128xf32, #tpu.memory_space<vmem>>, vector<1x2x1x128xf32>
    %169 = vector.shape_cast %168 : vector<1x2x1x128xf32> to vector<2x1x128xf32>
    %170 = vector.shape_cast %167 : vector<2x1x128xf32> to vector<1x2x1x128xf32>
    tpu.vector_store %arg4[%c0_148, %c0_149, %c0_150, %c0_151], %170 {strides = array<i32>} : memref<1x2x4x128xf32, #tpu.memory_space<vmem>>, vector<1x2x1x128xf32>,
    %171 = vector.extract_strided_slice %156 {offsets = [0, 1, 0], sizes = [2, 3, 128], strides = [1, 1, 1]} : vector<2x4x128xf32> to vector<2x3x128xf32>
    %172 = vector.extract_strided_slice %164 {offsets = [0, 1, 0], sizes = [2, 3, 128], strides = [1, 1, 1]} : vector<2x4x128xf32> to vector<2x3x128xf32>
    %173 = arith.maximumf %171, %172 : vector<2x3x128xf32>
    %174 = vector.extract_strided_slice %164 {offsets = [0, 0, 0], sizes = [2, 3, 128], strides = [1, 1, 1]} : vector<2x4x128xf32> to vector<2x3x128xf32>
    %175 = arith.maximumf %173, %174 : vector<2x3x128xf32>
    %c0_152 = arith.constant 0 : index
    %c0_153 = arith.constant 0 : index
    %c1_154 = arith.constant 1 : index
    %c0_155 = arith.constant 0 : index
    %176 = vector.load %arg4[%c0_152, %c0_153, %c1_154, %c0_155] : memref<1x2x4x128xf32, #tpu.memory_space<vmem>>, vector<1x2x3x128xf32>
    %177 = vector.shape_cast %176 : vector<1x2x3x128xf32> to vector<2x3x128xf32>
    %178 = vector.shape_cast %175 : vector<2x3x128xf32> to vector<1x2x3x128xf32>
    tpu.vector_store %arg4[%c0_152, %c0_153, %c1_154, %c0_155], %178 {strides = array<i32>} : memref<1x2x4x128xf32, #tpu.memory_space<vmem>>, vector<1x2x3x128xf32>,
    return
  }
  func.func @transform_0(%arg0: i32, %arg1: i32) -> (i32, i32, i32, i32, i32) {
    %c0_i32 = arith.constant 0 : i32
    %c0_i32_0 = arith.constant 0 : i32
    %c0_i32_1 = arith.constant 0 : i32
    %c0_i32_2 = arith.constant 0 : i32
    %c0_i32_3 = arith.constant 0 : i32
    return %arg0, %c0_i32, %c0_i32_0, %c0_i32_1, %c0_i32_2 : i32, i32, i32, i32, i32
  }
  func.func @transform_1(%arg0: i32, %arg1: i32) -> (i32, i32) {
    %c0_i32 = arith.constant 0 : i32
    %c0_i32_0 = arith.constant 0 : i32
    %c0_i32_1 = arith.constant 0 : i32
    return %c0_i32, %c0_i32_0 : i32, i32
  }
  func.func @transform_2(%arg0: i32, %arg1: i32) -> (i32, i32, i32, i32) {
    %c0_i32 = arith.constant 0 : i32
    %c0_i32_0 = arith.constant 0 : i32
    %c0_i32_1 = arith.constant 0 : i32
    return %arg0, %arg1, %c0_i32, %c0_i32_0 : i32, i32, i32, i32
  }
}

</mosaic_0001>

<llo_original>
// kernel: tpu_custom_call.1
$region0: #{tpu_custom_call.1}
  #allocation0 [shape = 'u32[]', space=smem, size = 0x4, offset = 0x4, fixed_abs, tag = 'smem constant byte address 0x4 - core index']
  #allocation1 [shape = 'u32[144,128]{1,0:T(1,128)}', space=vmem, size = 0x12000, scoped, tag = 'internal scratch']
  #allocation2 [shape = 'bf16[6,2,16,37]{3,2,1,0:T(16,128)(2,1)}', space=vmem, size = 0xc000, scoped, tag = 'scratch operand']
  %s0 = inlined_call_operand.vmem [shape: bf16[2,8,11,5,4], index: 0, kind: input, shape index: {}]
  %s1 = inlined_call_operand.vmem [shape: bf16[37,128], index: 1, kind: input, shape index: {}]
  %s2 = inlined_call_operand.hbm [shape: f32[2,4,4,128], index: 2, kind: output, shape index: {}]
  %s3 = sld [smem:[#allocation0]]
  $region49: #{tpu_custom_call.1} parent=0
    _
  %s5 = ssub.s32 1, %s3
  %s6 = scalar_select 0, %s5, %s3
  $region1: #{tpu_custom_call.1} parent=0
    #allocation3 [shape = 'u8[8192]{0}', space=vmem, size = 0x2000, scoped, tag = 'output window, operand 0']
    #allocation4 [shape = 's32[2]{0}', space=sflag, size = 0x8, scoped, tag = 'scoped memory for tpu_custom_call.1']
    %7 = vsyncpa [#allocation4], 0
    %s8 = scalar_lea.sflag [#allocation4], 1
    %9 = vsyncpa %s8, 0
    loop: start=0, step=1, limit=6
    $region2: #{tpu_custom_call.1} parent=1 // loop_pre_header
      _
    $region3: #{tpu_custom_call.1} parent=1 // loop_header
      %s11 = sphi 0, %s15
      %p12 = scmp.ge.s32.totalorder %s11, 6
      %s18 = sphi 0, %s30
      %s19 = sphi 0, %s26
      %s20 = sphi 0, %s18
      %s21 = sphi 0, %s19
      %s22 = sphi 0, %s20
      %s23 = sphi 0, %s21
      %s33 = sphi 0, %s35
      %s36 = sphi 0, %s33
      %s37 = sphi 0, %s36
      %s53 = sphi 0, %s37
      %s57 = sphi 0, %s57
      %s59 = sphi 0, %s57
      %s60 = sphi 0, %s59
      %s74 = sphi 0, %s60
      %s82 = sphi 0, %s84
      %s85 = sphi 0, %s82
      %s86 = sphi 0, %s85
      %s102 = sphi 0, %s86
    $region4: #{tpu_custom_call.1} parent=1 // loop_header_branch
      %14 = sbr.rel (%p12) target = $region8
    $region5: #{tpu_custom_call.1} parent=1 // loop_body
      %s16 = ssub.s32 %s11, 1
      %s17 = ssub.s32 %s11, 2
      %s24 = sadd.s32 1, %s19
      %p25 = scmp.ge.s32.totalorder %s24, 2
      %s26 = scalar_select %p25, 0, %s24
      %s27 = sadd.s32 1, %s18
      %s28 = scalar_select %p25, %s27, %s18
      %p29 = scmp.ge.s32.totalorder %s28, 2
      %s30 = scalar_select %p29, 0, %s28
      %s31 = ssub.s32 %s18, %s30
      %p32 = scmp.eq.s32.totalorder %s31, 0
      %s34 = sadd.s32 %s33, 1
      %s35 = scalar_select %p32, %s33, %s34
      %p38 = pneg %p32
      %p39 = scmp.eq.s32.totalorder %s11, 3
      %p40 = por %p38, %p39
      %p41 = scmp.ne.s32.totalorder %s33, %s36
      %p42 = scmp.eq.s32.totalorder %s11, 0
      %p43 = por %p41, %p42
      %p44 = scmp.ne.s32.totalorder %s33, %s36
      %p45 = scmp.eq.s32.totalorder %s16, 3
      %p46 = por %p44, %p45
      %p47 = scmp.ne.s32.totalorder %s36, %s37
      %p48 = scmp.eq.s32.totalorder %s16, 0
      %p49 = por %p47, %p48
      %p50 = scmp.ne.s32.totalorder %s36, %s37
      %p51 = scmp.eq.s32.totalorder %s17, 3
      %p52 = por %p50, %p51
      %p54 = scmp.ne.s32.totalorder %s37, %s53
      %p55 = scmp.eq.s32.totalorder %s17, 0
      %p56 = por %p54, %p55
      %s58 = sadd.s32 %s57, 1
      %p61 = scmp.eq.s32.totalorder %s11, 3
      %p62 = scmp.ne.s32.totalorder %s57, %s59
      %p63 = scmp.eq.s32.totalorder %s11, 0
      %p64 = por %p62, %p63
      %p65 = scmp.ne.s32.totalorder %s57, %s59
      %p66 = scmp.eq.s32.totalorder %s16, 3
      %p67 = por %p65, %p66
      %p68 = scmp.ne.s32.totalorder %s59, %s60
      %p69 = scmp.eq.s32.totalorder %s16, 0
      %p70 = por %p68, %p69
      %p71 = scmp.ne.s32.totalorder %s59, %s60
      %p72 = scmp.eq.s32.totalorder %s17, 3
      %p73 = por %p71, %p72
      %p75 = scmp.ne.s32.totalorder %s60, %s74
      %p76 = scmp.eq.s32.totalorder %s17, 0
      %p77 = por %p75, %p76
      %s78 = ssub.s32 %s18, %s30
      %s79 = ssub.s32 %s19, %s26
      %s80 = sor.u32 %s78, %s79
      %p81 = scmp.eq.s32.totalorder %s80, 0
      %s83 = sadd.s32 %s82, 1
      %s84 = scalar_select %p81, %s82, %s83
      %p87 = pneg %p81
      %p88 = scmp.eq.s32.totalorder %s11, 3
      %p89 = por %p87, %p88
      %p90 = scmp.ne.s32.totalorder %s82, %s85
      %p91 = scmp.eq.s32.totalorder %s11, 0
      %p92 = por %p90, %p91
      %p93 = scmp.ne.s32.totalorder %s82, %s85
      %p94 = scmp.eq.s32.totalorder %s16, 3
      %p95 = por %p93, %p94
      %p96 = scmp.ne.s32.totalorder %s85, %s86
      %p97 = scmp.eq.s32.totalorder %s16, 0
      %p98 = por %p96, %p97
      %p99 = scmp.ne.s32.totalorder %s85, %s86
      %p100 = scmp.eq.s32.totalorder %s17, 3
      %p101 = por %p99, %p100
      %p103 = scmp.ne.s32.totalorder %s86, %s102
      %p104 = scmp.eq.s32.totalorder %s17, 0
      %p105 = por %p103, %p104
      %p106 = scmp.le.s32.totalorder 1, %s11
      %p107 = scmp.lt.s32.totalorder %s11, 5
      %p108 = pnand %p106, %p107
      %p109 = pneg %p108
      // Predicated region
      $region9: #{tpu_custom_call.1} parent=5 // pred_check
        _
      $region10: #{tpu_custom_call.1} parent=5 // pred_check_branch
        %111 = sbr.rel (%p108) target = $region12
      $region11: #{tpu_custom_call.1} parent=5 // pred_region
        %s112 = ssub.s32 %s11, 1
        // Predicated region
        $region13: #{tpu_custom_call.1} parent=11 // pred_check
          %p113 = pneg %p70
        $region14: #{tpu_custom_call.1} parent=11 // pred_check_branch
          %115 = sbr.rel (%p113) target = $region16
        $region15: #{tpu_custom_call.1} parent=11 // pred_region
          _
        $region16: #{tpu_custom_call.1} parent=11 // pred_fallthru
          _
      $region12: #{tpu_custom_call.1} parent=5 // pred_fallthru
        _
      %p116 = scmp.lt.s32.totalorder %s11, 4
      // Predicated region
      $region17: #{tpu_custom_call.1} parent=5 // pred_check
        %p117 = pneg %p116
      $region18: #{tpu_custom_call.1} parent=5 // pred_check_branch
        %119 = sbr.rel (%p117) target = $region20
      $region19: #{tpu_custom_call.1} parent=5 // pred_region
        // Predicated region
        $region21: #{tpu_custom_call.1} parent=19 // pred_check
          %p120 = pneg %p43
        $region22: #{tpu_custom_call.1} parent=19 // pred_check_branch
          %122 = sbr.rel (%p120) target = $region24
        $region23: #{tpu_custom_call.1} parent=19 // pred_region
          %p123 = scmp.lt.s32.totalorder %s18, 1
          %s124 = scalar_select %p123, %s18, 1
          %s125 = smul.addr %s124, 88
          %s126 = smul.addr %s125, 4
          %s127 = scalar_lea.vmem %s0, %s126
        $region24: #{tpu_custom_call.1} parent=19 // pred_fallthru
          _
      $region20: #{tpu_custom_call.1} parent=5 // pred_fallthru
        _
      %p128 = scmp.le.s32.totalorder 1, %s11
      %p129 = scmp.lt.s32.totalorder %s11, 5
      %p130 = pnand %p128, %p129
      %p131 = pneg %p130
      // Predicated region
      $region25: #{tpu_custom_call.1} parent=5 // pred_check
        _
      $region26: #{tpu_custom_call.1} parent=5 // pred_check_branch
        %133 = sbr.rel (%p130) target = $region28
      $region27: #{tpu_custom_call.1} parent=5 // pred_region
        %s134 = ssub.s32 %s11, 1
        %p135 = scmp.lt.s32.totalorder %s20, 1
        %s136 = scalar_select %p135, %s20, 1
        %s137 = smul.addr %s136, 88
        %s138 = smul.addr %s137, 4
        %s139 = scalar_lea.vmem %s0, %s138
        %p140 = pneg %p49
        %p141 = pneg %p46
        %p142 = pneg %p70
        %p143 = pneg %p67
        %p144 = pneg %p98
        %p145 = pneg %p95
        %s146 = sand.u32 %s85, 1
        %s147 = scalar_lea.sflag [#allocation4], %s146
        %s148 = sand.u32 %s85, 1
        %s149 = smul.addr %s148, 8
        %s150 = scalar_lea.vmem [#allocation3], %s149
        %p151 = scmp.lt.s32.totalorder %s20, 1
        %s152 = scalar_select %p151, %s20, 1
        %s153 = smul.addr %s152, 88
        %s154 = smul.addr %s153, 4
        %s155 = scalar_lea.vmem %s0, %s154
        %s156 = smul.u32 2, %s21
        %p158 = scmp.eq.s32.totalorder %s20, 0
        %p159 = scmp.eq.s32.totalorder %s21, 0
        %p160 = pnand %p158, %p159
        %p161 = pneg %p160
        // Predicated region
        $region29: #{tpu_custom_call.1} parent=27 // pred_check
          _
        $region30: #{tpu_custom_call.1} parent=27 // pred_check_branch
          %163 = sbr.rel (%p160) target = $region32
        $region31: #{tpu_custom_call.1} parent=27 // pred_region
          %vm164 = vcmask 302080
          %165 = vst.msk [vmem:[#allocation2] sm:$0xff] %vm164, 0
          %166 = vst.msk [vmem:[#allocation2 + $0x8] sm:$0xff] %vm164, 0
          %167 = vst.msk [vmem:[#allocation2 + $0x10] sm:$0xff] %vm164, 0
          %168 = vst.msk [vmem:[#allocation2 + $0x18] sm:$0xff] %vm164, 0
          %169 = vst.msk [vmem:[#allocation2 + $0x20] sm:$0xff] %vm164, 0
          %170 = vst.msk [vmem:[#allocation2 + $0x28] sm:$0xff] %vm164, 0
          %171 = vst.msk [vmem:[#allocation2 + $0x30] sm:$0xff] %vm164, 0
          %172 = vst.msk [vmem:[#allocation2 + $0x38] sm:$0xff] %vm164, 0
          %173 = vst.msk [vmem:[#allocation2 + $0x40] sm:$0xff] %vm164, 0
          %174 = vst.msk [vmem:[#allocation2 + $0x48] sm:$0xff] %vm164, 0
          %175 = vst.msk [vmem:[#allocation2 + $0x50] sm:$0xff] %vm164, 0
          %176 = vst.msk [vmem:[#allocation2 + $0x58] sm:$0xff] %vm164, 0
        $region32: #{tpu_custom_call.1} parent=27 // pred_fallthru
          _
        %v177 = vlaneseq
        %v178 = vshrl.u32 %v177, 7
        %v179 = vadd.s32 %v178, 8
        %vm180 = vcmp.lt.s32.totalorder %v178, 4
        %vm181 = vcmp.lt.s32.totalorder %v179, 4
        %v182 = vsel %vm180, 1, 0
        %v183 = vsel %vm181, 1, 0
        %vm184 = vcmp.eq.s32.totalorder %v182, 1
        %vm185 = vcmp.eq.s32.totalorder %v183, 1
        %v186 = vsel %vm184, 1, 0
        %v187 = vsel %vm185, 1, 0
        %v188 = vcvt.s32.f32 %v186
        %v189 = vcvt.s32.f32 %v187
        %v190 = vpack.c.bf16 %v189, %v188
        %vm191 = vcmask 302368
        %192 = vst.msk [vmem:[#allocation2] sm:$0xff] %vm191, %v190
        %193 = vst.msk [vmem:[#allocation2 + $0x8] sm:$0xff] %vm191, %v190
        %194 = vst.msk [vmem:[#allocation2 + $0x10] sm:$0xff] %vm191, %v190
        %195 = vst.msk [vmem:[#allocation2 + $0x18] sm:$0xff] %vm191, %v190
        %196 = vst.msk [vmem:[#allocation2 + $0x20] sm:$0xff] %vm191, %v190
        %197 = vst.msk [vmem:[#allocation2 + $0x28] sm:$0xff] %vm191, %v190
        %198 = vst.msk [vmem:[#allocation2 + $0x30] sm:$0xff] %vm191, %v190
        %199 = vst.msk [vmem:[#allocation2 + $0x38] sm:$0xff] %vm191, %v190
        %200 = vst.msk [vmem:[#allocation2 + $0x40] sm:$0xff] %vm191, %v190
        %201 = vst.msk [vmem:[#allocation2 + $0x48] sm:$0xff] %vm191, %v190
        %202 = vst.msk [vmem:[#allocation2 + $0x50] sm:$0xff] %vm191, %v190
        %203 = vst.msk [vmem:[#allocation2 + $0x58] sm:$0xff] %vm191, %v190
        %s204 = smul.u32 %s21, 4
        %s205 = smul.addr %s204, 4
        %s206 = scalar_lea.vmem %s155, %s205
        %v207 = vld [vmem:[%s206] sm:$0x3]
        %v208 = vld [vmem:[%s206 + $0x4] sm:$0x3]
        %v209 = vld [vmem:[%s206 + $0x8] sm:$0x3]
        %v210 = vld [vmem:[%s206 + $0xc] sm:$0x3]
        %v211 = vld [vmem:[%s206 + $0x10] sm:$0x3]
        %v212 = vld [vmem:[%s206 + $0x14] sm:$0x3]
        %vm213 = vcmask 25600
        %214 = vst.msk [vmem:[#allocation2] sm:$0x3] %vm213, %v207
        %215 = vst.msk [vmem:[#allocation2 + $0x10] sm:$0x3] %vm213, %v208
        %216 = vst.msk [vmem:[#allocation2 + $0x20] sm:$0x3] %vm213, %v209
        %217 = vst.msk [vmem:[#allocation2 + $0x30] sm:$0x3] %vm213, %v210
        %218 = vst.msk [vmem:[#allocation2 + $0x40] sm:$0x3] %vm213, %v211
        %219 = vst.msk [vmem:[#allocation2 + $0x50] sm:$0x3] %vm213, %v212
        %s220 = sadd.s32 %s204, 22
        %s221 = smul.addr %s220, 4
        %s222 = scalar_lea.vmem %s155, %s221
        %v223 = vld [vmem:[%s222] sm:$0x3]
        %v224 = vld [vmem:[%s222 + $0x4] sm:$0x3]
        %v225 = vld [vmem:[%s222 + $0x8] sm:$0x3]
        %v226 = vld [vmem:[%s222 + $0xc] sm:$0x3]
        %v227 = vld [vmem:[%s222 + $0x10] sm:$0x3]
        %v228 = vld [vmem:[%s222 + $0x14] sm:$0x3]
        %s229 = scalar_lea.vmem [#allocation2], 8
        %230 = vst.msk [vmem:[%s229] sm:$0x3] %vm213, %v223
        %231 = vst.msk [vmem:[%s229 + $0x10] sm:$0x3] %vm213, %v224
        %232 = vst.msk [vmem:[%s229 + $0x20] sm:$0x3] %vm213, %v225
        %233 = vst.msk [vmem:[%s229 + $0x30] sm:$0x3] %vm213, %v226
        %234 = vst.msk [vmem:[%s229 + $0x40] sm:$0x3] %vm213, %v227
        %235 = vst.msk [vmem:[%s229 + $0x50] sm:$0x3] %vm213, %v228
        %s236 = sadd.s32 %s204, 11
        %s237 = smul.addr %s236, 4
        %s238 = scalar_lea.vmem %s155, %s237
        %v239 = vld [vmem:[%s238] sm:$0x3]
        %v240 = vld [vmem:[%s238 + $0x4] sm:$0x3]
        %v241 = vld [vmem:[%s238 + $0x8] sm:$0x3]
        %v242 = vld [vmem:[%s238 + $0xc] sm:$0x3]
        %v243 = vld [vmem:[%s238 + $0x10] sm:$0x3]
        %v244 = vld [vmem:[%s238 + $0x14] sm:$0x3]
        %v251 = vunpack.c.l.b16 %v239
        %v252 = vunpack.c.l.b16 %v240
        %v253 = vunpack.c.l.b16 %v241
        %v254 = vunpack.c.l.b16 %v242
        %v255 = vunpack.c.l.b16 %v243
        %v256 = vunpack.c.l.b16 %v244
        %v257 = vpack.c.b16 %v251, %v251
        %v258 = vpack.c.b16 %v252, %v252
        %v259 = vpack.c.b16 %v253, %v253
        %v260 = vpack.c.b16 %v254, %v254
        %v261 = vpack.c.b16 %v255, %v255
        %v262 = vpack.c.b16 %v256, %v256
        %263 = vrot.lane.b32.xlu0 %v257, 4
        %v264 = vpop.permute.xlu0 %263
        %265 = vrot.lane.b32.xlu0 %v258, 4
        %v266 = vpop.permute.xlu0 %265
        %267 = vrot.lane.b32.xlu0 %v259, 4
        %v268 = vpop.permute.xlu0 %267
        %269 = vrot.lane.b32.xlu0 %v260, 4
        %v270 = vpop.permute.xlu0 %269
        %271 = vrot.lane.b32.xlu0 %v261, 4
        %v272 = vpop.permute.xlu0 %271
        %273 = vrot.lane.b32.xlu0 %v262, 4
        %v274 = vpop.permute.xlu0 %273
        %vm281 = vcmask 58400
        %282 = vst.msk [vmem:[#allocation2] sm:$0x3] %vm281, %v264
        %283 = vst.msk [vmem:[#allocation2 + $0x10] sm:$0x3] %vm281, %v266
        %284 = vst.msk [vmem:[#allocation2 + $0x20] sm:$0x3] %vm281, %v268
        %285 = vst.msk [vmem:[#allocation2 + $0x30] sm:$0x3] %vm281, %v270
        %286 = vst.msk [vmem:[#allocation2 + $0x40] sm:$0x3] %vm281, %v272
        %287 = vst.msk [vmem:[#allocation2 + $0x50] sm:$0x3] %vm281, %v274
        %s288 = sadd.s32 %s204, 33
        %s289 = smul.addr %s288, 4
        %s290 = scalar_lea.vmem %s155, %s289
        %v291 = vld [vmem:[%s290] sm:$0x3]
        %v292 = vld [vmem:[%s290 + $0x4] sm:$0x3]
        %v293 = vld [vmem:[%s290 + $0x8] sm:$0x3]
        %v294 = vld [vmem:[%s290 + $0xc] sm:$0x3]
        %v295 = vld [vmem:[%s290 + $0x10] sm:$0x3]
        %v296 = vld [vmem:[%s290 + $0x14] sm:$0x3]
        %v303 = vunpack.c.l.b16 %v291
        %v304 = vunpack.c.l.b16 %v292
        %v305 = vunpack.c.l.b16 %v293
        %v306 = vunpack.c.l.b16 %v294
        %v307 = vunpack.c.l.b16 %v295
        %v308 = vunpack.c.l.b16 %v296
        %v309 = vpack.c.b16 %v303, %v303
        %v310 = vpack.c.b16 %v304, %v304
        %v311 = vpack.c.b16 %v305, %v305
        %v312 = vpack.c.b16 %v306, %v306
        %v313 = vpack.c.b16 %v307, %v307
        %v314 = vpack.c.b16 %v308, %v308
        %315 = vrot.lane.b32.xlu0 %v309, 4
        %v316 = vpop.permute.xlu0 %315
        %317 = vrot.lane.b32.xlu0 %v310, 4
        %v318 = vpop.permute.xlu0 %317
        %319 = vrot.lane.b32.xlu0 %v311, 4
        %v320 = vpop.permute.xlu0 %319
        %321 = vrot.lane.b32.xlu0 %v312, 4
        %v322 = vpop.permute.xlu0 %321
        %323 = vrot.lane.b32.xlu0 %v313, 4
        %v324 = vpop.permute.xlu0 %323
        %325 = vrot.lane.b32.xlu0 %v314, 4
        %v326 = vpop.permute.xlu0 %325
        %333 = vst.msk [vmem:[%s229] sm:$0x3] %vm281, %v316
        %334 = vst.msk [vmem:[%s229 + $0x10] sm:$0x3] %vm281, %v318
        %335 = vst.msk [vmem:[%s229 + $0x20] sm:$0x3] %vm281, %v320
        %336 = vst.msk [vmem:[%s229 + $0x30] sm:$0x3] %vm281, %v322
        %337 = vst.msk [vmem:[%s229 + $0x40] sm:$0x3] %vm281, %v324
        %338 = vst.msk [vmem:[%s229 + $0x50] sm:$0x3] %vm281, %v326
        %v339 = vld [vmem:[%s222] sm:$0x3]
        %v340 = vld [vmem:[%s222 + $0x4] sm:$0x3]
        %v341 = vld [vmem:[%s222 + $0x8] sm:$0x3]
        %v342 = vld [vmem:[%s222 + $0xc] sm:$0x3]
        %v343 = vld [vmem:[%s222 + $0x10] sm:$0x3]
        %v344 = vld [vmem:[%s222 + $0x14] sm:$0x3]
        %v351 = vunpack.c.l.b16 %v339
        %v352 = vunpack.c.l.b16 %v340
        %v353 = vunpack.c.l.b16 %v341
        %v354 = vunpack.c.l.b16 %v342
        %v355 = vunpack.c.l.b16 %v343
        %v356 = vunpack.c.l.b16 %v344
        %v357 = vpack.c.b16 %v351, %v351
        %v358 = vpack.c.b16 %v352, %v352
        %v359 = vpack.c.b16 %v353, %v353
        %v360 = vpack.c.b16 %v354, %v354
        %v361 = vpack.c.b16 %v355, %v355
        %v362 = vpack.c.b16 %v356, %v356
        %363 = vrot.lane.b32.xlu0 %v357, 8
        %v364 = vpop.permute.xlu0 %363
        %365 = vrot.lane.b32.xlu0 %v358, 8
        %v366 = vpop.permute.xlu0 %365
        %367 = vrot.lane.b32.xlu0 %v359, 8
        %v368 = vpop.permute.xlu0 %367
        %369 = vrot.lane.b32.xlu0 %v360, 8
        %v370 = vpop.permute.xlu0 %369
        %371 = vrot.lane.b32.xlu0 %v361, 8
        %v372 = vpop.permute.xlu0 %371
        %373 = vrot.lane.b32.xlu0 %v362, 8
        %v374 = vpop.permute.xlu0 %373
        %vm381 = vcmask 91200
        %382 = vst.msk [vmem:[#allocation2] sm:$0x3] %vm381, %v364
        %383 = vst.msk [vmem:[#allocation2 + $0x10] sm:$0x3] %vm381, %v366
        %384 = vst.msk [vmem:[#allocation2 + $0x20] sm:$0x3] %vm381, %v368
        %385 = vst.msk [vmem:[#allocation2 + $0x30] sm:$0x3] %vm381, %v370
        %386 = vst.msk [vmem:[#allocation2 + $0x40] sm:$0x3] %vm381, %v372
        %387 = vst.msk [vmem:[#allocation2 + $0x50] sm:$0x3] %vm381, %v374
        %v388 = vld [vmem:[%s206] sm:$0x7]
        %v389 = vld [vmem:[%s206 + $0x4] sm:$0x7]
        %v390 = vld [vmem:[%s206 + $0x8] sm:$0x7]
        %v391 = vld [vmem:[%s206 + $0xc] sm:$0x7]
        %v392 = vld [vmem:[%s206 + $0x10] sm:$0x7]
        %v393 = vld [vmem:[%s206 + $0x14] sm:$0x7]
        %v400 = vunpack.c.l.b16 %v388
        %v401 = vunpack.c.l.b16 %v389
        %v402 = vunpack.c.l.b16 %v390
        %v403 = vunpack.c.l.b16 %v391
        %v404 = vunpack.c.l.b16 %v392
        %v405 = vunpack.c.l.b16 %v393
        %v406 = vpack.c.b16 %v400, %v400
        %v407 = vpack.c.b16 %v401, %v401
        %v408 = vpack.c.b16 %v402, %v402
        %v409 = vpack.c.b16 %v403, %v403
        %v410 = vpack.c.b16 %v404, %v404
        %v411 = vpack.c.b16 %v405, %v405
        %v413 = vshrl.u32 %v406, 16
        %v415 = vshll.u32 %v406, 16
        %v417 = vrot.slane %v415, 1
        %v418 = vor.u32 %v413, %v417
        %v420 = vshrl.u32 %v407, 16
        %v422 = vshll.u32 %v407, 16
        %v424 = vrot.slane %v422, 1
        %v425 = vor.u32 %v420, %v424
        %v427 = vshrl.u32 %v408, 16
        %v429 = vshll.u32 %v408, 16
        %v431 = vrot.slane %v429, 1
        %v432 = vor.u32 %v427, %v431
        %v434 = vshrl.u32 %v409, 16
        %v436 = vshll.u32 %v409, 16
        %v438 = vrot.slane %v436, 1
        %v439 = vor.u32 %v434, %v438
        %v441 = vshrl.u32 %v410, 16
        %v443 = vshll.u32 %v410, 16
        %v445 = vrot.slane %v443, 1
        %v446 = vor.u32 %v441, %v445
        %v448 = vshrl.u32 %v411, 16
        %v450 = vshll.u32 %v411, 16
        %v452 = vrot.slane %v450, 1
        %v453 = vor.u32 %v448, %v452
        %454 = vrot.lane.b32.xlu0 %v418, 8
        %v455 = vpop.permute.xlu0 %454
        %456 = vrot.lane.b32.xlu0 %v425, 8
        %v457 = vpop.permute.xlu0 %456
        %458 = vrot.lane.b32.xlu0 %v432, 8
        %v459 = vpop.permute.xlu0 %458
        %460 = vrot.lane.b32.xlu0 %v439, 8
        %v461 = vpop.permute.xlu0 %460
        %462 = vrot.lane.b32.xlu0 %v446, 8
        %v463 = vpop.permute.xlu0 %462
        %464 = vrot.lane.b32.xlu0 %v453, 8
        %v465 = vpop.permute.xlu0 %464
        %472 = vst.msk [vmem:[%s229] sm:$0x3] %vm381, %v455
        %473 = vst.msk [vmem:[%s229 + $0x10] sm:$0x3] %vm381, %v457
        %474 = vst.msk [vmem:[%s229 + $0x20] sm:$0x3] %vm381, %v459
        %475 = vst.msk [vmem:[%s229 + $0x30] sm:$0x3] %vm381, %v461
        %476 = vst.msk [vmem:[%s229 + $0x40] sm:$0x3] %vm381, %v463
        %477 = vst.msk [vmem:[%s229 + $0x50] sm:$0x3] %vm381, %v465
        %s478 = sadd.s32 %s204, 44
        %s479 = smul.addr %s478, 4
        %s480 = scalar_lea.vmem %s155, %s479
        %v481 = vld [vmem:[%s480] sm:$0x3]
        %v482 = vld [vmem:[%s480 + $0x4] sm:$0x3]
        %v483 = vld [vmem:[%s480 + $0x8] sm:$0x3]
        %v484 = vld [vmem:[%s480 + $0xc] sm:$0x3]
        %v485 = vld [vmem:[%s480 + $0x10] sm:$0x3]
        %v486 = vld [vmem:[%s480 + $0x14] sm:$0x3]
        %v493 = vunpack.c.l.b16 %v481
        %v494 = vunpack.c.l.b16 %v482
        %v495 = vunpack.c.l.b16 %v483
        %v496 = vunpack.c.l.b16 %v484
        %v497 = vunpack.c.l.b16 %v485
        %v498 = vunpack.c.l.b16 %v486
        %v499 = vpack.c.b16 %v493, %v493
        %v500 = vpack.c.b16 %v494, %v494
        %v501 = vpack.c.b16 %v495, %v495
        %v502 = vpack.c.b16 %v496, %v496
        %v503 = vpack.c.b16 %v497, %v497
        %v504 = vpack.c.b16 %v498, %v498
        %505 = vrot.lane.b32.xlu0 %v499, 12
        %v506 = vpop.permute.xlu0 %505
        %507 = vrot.lane.b32.xlu0 %v500, 12
        %v508 = vpop.permute.xlu0 %507
        %509 = vrot.lane.b32.xlu0 %v501, 12
        %v510 = vpop.permute.xlu0 %509
        %511 = vrot.lane.b32.xlu0 %v502, 12
        %v512 = vpop.permute.xlu0 %511
        %513 = vrot.lane.b32.xlu0 %v503, 12
        %v514 = vpop.permute.xlu0 %513
        %515 = vrot.lane.b32.xlu0 %v504, 12
        %v516 = vpop.permute.xlu0 %515
        %vm523 = vcmask 124000
        %524 = vst.msk [vmem:[#allocation2] sm:$0x3] %vm523, %v506
        %525 = vst.msk [vmem:[#allocation2 + $0x10] sm:$0x3] %vm523, %v508
        %526 = vst.msk [vmem:[#allocation2 + $0x20] sm:$0x3] %vm523, %v510
        %527 = vst.msk [vmem:[#allocation2 + $0x30] sm:$0x3] %vm523, %v512
        %528 = vst.msk [vmem:[#allocation2 + $0x40] sm:$0x3] %vm523, %v514
        %529 = vst.msk [vmem:[#allocation2 + $0x50] sm:$0x3] %vm523, %v516
        %s530 = sadd.s32 %s204, 66
        %s531 = smul.addr %s530, 4
        %s532 = scalar_lea.vmem %s155, %s531
        %v533 = vld [vmem:[%s532] sm:$0x3]
        %v534 = vld [vmem:[%s532 + $0x4] sm:$0x3]
        %v535 = vld [vmem:[%s532 + $0x8] sm:$0x3]
        %v536 = vld [vmem:[%s532 + $0xc] sm:$0x3]
        %v537 = vld [vmem:[%s532 + $0x10] sm:$0x3]
        %v538 = vld [vmem:[%s532 + $0x14] sm:$0x3]
        %v545 = vunpack.c.l.b16 %v533
        %v546 = vunpack.c.l.b16 %v534
        %v547 = vunpack.c.l.b16 %v535
        %v548 = vunpack.c.l.b16 %v536
        %v549 = vunpack.c.l.b16 %v537
        %v550 = vunpack.c.l.b16 %v538
        %v551 = vpack.c.b16 %v545, %v545
        %v552 = vpack.c.b16 %v546, %v546
        %v553 = vpack.c.b16 %v547, %v547
        %v554 = vpack.c.b16 %v548, %v548
        %v555 = vpack.c.b16 %v549, %v549
        %v556 = vpack.c.b16 %v550, %v550
        %557 = vrot.lane.b32.xlu0 %v551, 12
        %v558 = vpop.permute.xlu0 %557
        %559 = vrot.lane.b32.xlu0 %v552, 12
        %v560 = vpop.permute.xlu0 %559
        %561 = vrot.lane.b32.xlu0 %v553, 12
        %v562 = vpop.permute.xlu0 %561
        %563 = vrot.lane.b32.xlu0 %v554, 12
        %v564 = vpop.permute.xlu0 %563
        %565 = vrot.lane.b32.xlu0 %v555, 12
        %v566 = vpop.permute.xlu0 %565
        %567 = vrot.lane.b32.xlu0 %v556, 12
        %v568 = vpop.permute.xlu0 %567
        %575 = vst.msk [vmem:[%s229] sm:$0x3] %vm523, %v558
        %576 = vst.msk [vmem:[%s229 + $0x10] sm:$0x3] %vm523, %v560
        %577 = vst.msk [vmem:[%s229 + $0x20] sm:$0x3] %vm523, %v562
        %578 = vst.msk [vmem:[%s229 + $0x30] sm:$0x3] %vm523, %v564
        %579 = vst.msk [vmem:[%s229 + $0x40] sm:$0x3] %vm523, %v566
        %580 = vst.msk [vmem:[%s229 + $0x50] sm:$0x3] %vm523, %v568
        %s581 = sadd.s32 %s204, 55
        %s582 = smul.addr %s581, 4
        %s583 = scalar_lea.vmem %s155, %s582
        %v584 = vld [vmem:[%s583] sm:$0x3]
        %v585 = vld [vmem:[%s583 + $0x4] sm:$0x3]
        %v586 = vld [vmem:[%s583 + $0x8] sm:$0x3]
        %v587 = vld [vmem:[%s583 + $0xc] sm:$0x3]
        %v588 = vld [vmem:[%s583 + $0x10] sm:$0x3]
        %v589 = vld [vmem:[%s583 + $0x14] sm:$0x3]
        %v596 = vunpack.c.l.b16 %v584
        %v597 = vunpack.c.l.b16 %v585
        %v598 = vunpack.c.l.b16 %v586
        %v599 = vunpack.c.l.b16 %v587
        %v600 = vunpack.c.l.b16 %v588
        %v601 = vunpack.c.l.b16 %v589
        %v602 = vpack.c.b16 %v596, %v596
        %v603 = vpack.c.b16 %v597, %v597
        %v604 = vpack.c.b16 %v598, %v598
        %v605 = vpack.c.b16 %v599, %v599
        %v606 = vpack.c.b16 %v600, %v600
        %v607 = vpack.c.b16 %v601, %v601
        %608 = vrot.lane.b32.xlu0 %v602, 16
        %v609 = vpop.permute.xlu0 %608
        %610 = vrot.lane.b32.xlu0 %v603, 16
        %v611 = vpop.permute.xlu0 %610
        %612 = vrot.lane.b32.xlu0 %v604, 16
        %v613 = vpop.permute.xlu0 %612
        %614 = vrot.lane.b32.xlu0 %v605, 16
        %v615 = vpop.permute.xlu0 %614
        %616 = vrot.lane.b32.xlu0 %v606, 16
        %v617 = vpop.permute.xlu0 %616
        %618 = vrot.lane.b32.xlu0 %v607, 16
        %v619 = vpop.permute.xlu0 %618
        %vm626 = vcmask 156800
        %627 = vst.msk [vmem:[#allocation2] sm:$0x3] %vm626, %v609
        %628 = vst.msk [vmem:[#allocation2 + $0x10] sm:$0x3] %vm626, %v611
        %629 = vst.msk [vmem:[#allocation2 + $0x20] sm:$0x3] %vm626, %v613
        %630 = vst.msk [vmem:[#allocation2 + $0x30] sm:$0x3] %vm626, %v615
        %631 = vst.msk [vmem:[#allocation2 + $0x40] sm:$0x3] %vm626, %v617
        %632 = vst.msk [vmem:[#allocation2 + $0x50] sm:$0x3] %vm626, %v619
        %s633 = sadd.s32 %s204, 77
        %s634 = smul.addr %s633, 4
        %s635 = scalar_lea.vmem %s155, %s634
        %v636 = vld [vmem:[%s635] sm:$0x3]
        %v637 = vld [vmem:[%s635 + $0x4] sm:$0x3]
        %v638 = vld [vmem:[%s635 + $0x8] sm:$0x3]
        %v639 = vld [vmem:[%s635 + $0xc] sm:$0x3]
        %v640 = vld [vmem:[%s635 + $0x10] sm:$0x3]
        %v641 = vld [vmem:[%s635 + $0x14] sm:$0x3]
        %v648 = vunpack.c.l.b16 %v636
        %v649 = vunpack.c.l.b16 %v637
        %v650 = vunpack.c.l.b16 %v638
        %v651 = vunpack.c.l.b16 %v639
        %v652 = vunpack.c.l.b16 %v640
        %v653 = vunpack.c.l.b16 %v641
        %v654 = vpack.c.b16 %v648, %v648
        %v655 = vpack.c.b16 %v649, %v649
        %v656 = vpack.c.b16 %v650, %v650
        %v657 = vpack.c.b16 %v651, %v651
        %v658 = vpack.c.b16 %v652, %v652
        %v659 = vpack.c.b16 %v653, %v653
        %660 = vrot.lane.b32.xlu0 %v654, 16
        %v661 = vpop.permute.xlu0 %660
        %662 = vrot.lane.b32.xlu0 %v655, 16
        %v663 = vpop.permute.xlu0 %662
        %664 = vrot.lane.b32.xlu0 %v656, 16
        %v665 = vpop.permute.xlu0 %664
        %666 = vrot.lane.b32.xlu0 %v657, 16
        %v667 = vpop.permute.xlu0 %666
        %668 = vrot.lane.b32.xlu0 %v658, 16
        %v669 = vpop.permute.xlu0 %668
        %670 = vrot.lane.b32.xlu0 %v659, 16
        %v671 = vpop.permute.xlu0 %670
        %678 = vst.msk [vmem:[%s229] sm:$0x3] %vm626, %v661
        %679 = vst.msk [vmem:[%s229 + $0x10] sm:$0x3] %vm626, %v663
        %680 = vst.msk [vmem:[%s229 + $0x20] sm:$0x3] %vm626, %v665
        %681 = vst.msk [vmem:[%s229 + $0x30] sm:$0x3] %vm626, %v667
        %682 = vst.msk [vmem:[%s229 + $0x40] sm:$0x3] %vm626, %v669
        %683 = vst.msk [vmem:[%s229 + $0x50] sm:$0x3] %vm626, %v671
        %v684 = vld [vmem:[%s532] sm:$0x3]
        %v685 = vld [vmem:[%s532 + $0x4] sm:$0x3]
        %v686 = vld [vmem:[%s532 + $0x8] sm:$0x3]
        %v687 = vld [vmem:[%s532 + $0xc] sm:$0x3]
        %v688 = vld [vmem:[%s532 + $0x10] sm:$0x3]
        %v689 = vld [vmem:[%s532 + $0x14] sm:$0x3]
        %v696 = vunpack.c.l.b16 %v684
        %v697 = vunpack.c.l.b16 %v685
        %v698 = vunpack.c.l.b16 %v686
        %v699 = vunpack.c.l.b16 %v687
        %v700 = vunpack.c.l.b16 %v688
        %v701 = vunpack.c.l.b16 %v689
        %v702 = vpack.c.b16 %v696, %v696
        %v703 = vpack.c.b16 %v697, %v697
        %v704 = vpack.c.b16 %v698, %v698
        %v705 = vpack.c.b16 %v699, %v699
        %v706 = vpack.c.b16 %v700, %v700
        %v707 = vpack.c.b16 %v701, %v701
        %708 = vrot.lane.b32.xlu0 %v702, 20
        %v709 = vpop.permute.xlu0 %708
        %710 = vrot.lane.b32.xlu0 %v703, 20
        %v711 = vpop.permute.xlu0 %710
        %712 = vrot.lane.b32.xlu0 %v704, 20
        %v713 = vpop.permute.xlu0 %712
        %714 = vrot.lane.b32.xlu0 %v705, 20
        %v715 = vpop.permute.xlu0 %714
        %716 = vrot.lane.b32.xlu0 %v706, 20
        %v717 = vpop.permute.xlu0 %716
        %718 = vrot.lane.b32.xlu0 %v707, 20
        %v719 = vpop.permute.xlu0 %718
        %vm726 = vcmask 189600
        %727 = vst.msk [vmem:[#allocation2] sm:$0x3] %vm726, %v709
        %728 = vst.msk [vmem:[#allocation2 + $0x10] sm:$0x3] %vm726, %v711
        %729 = vst.msk [vmem:[#allocation2 + $0x20] sm:$0x3] %vm726, %v713
        %730 = vst.msk [vmem:[#allocation2 + $0x30] sm:$0x3] %vm726, %v715
        %731 = vst.msk [vmem:[#allocation2 + $0x40] sm:$0x3] %vm726, %v717
        %732 = vst.msk [vmem:[#allocation2 + $0x50] sm:$0x3] %vm726, %v719
        %v733 = vld [vmem:[%s480] sm:$0x7]
        %v734 = vld [vmem:[%s480 + $0x4] sm:$0x7]
        %v735 = vld [vmem:[%s480 + $0x8] sm:$0x7]
        %v736 = vld [vmem:[%s480 + $0xc] sm:$0x7]
        %v737 = vld [vmem:[%s480 + $0x10] sm:$0x7]
        %v738 = vld [vmem:[%s480 + $0x14] sm:$0x7]
        %v745 = vunpack.c.l.b16 %v733
        %v746 = vunpack.c.l.b16 %v734
        %v747 = vunpack.c.l.b16 %v735
        %v748 = vunpack.c.l.b16 %v736
        %v749 = vunpack.c.l.b16 %v737
        %v750 = vunpack.c.l.b16 %v738
        %v751 = vpack.c.b16 %v745, %v745
        %v752 = vpack.c.b16 %v746, %v746
        %v753 = vpack.c.b16 %v747, %v747
        %v754 = vpack.c.b16 %v748, %v748
        %v755 = vpack.c.b16 %v749, %v749
        %v756 = vpack.c.b16 %v750, %v750
        %v758 = vshrl.u32 %v751, 16
        %v760 = vshll.u32 %v751, 16
        %v762 = vrot.slane %v760, 1
        %v763 = vor.u32 %v758, %v762
        %v765 = vshrl.u32 %v752, 16
        %v767 = vshll.u32 %v752, 16
        %v769 = vrot.slane %v767, 1
        %v770 = vor.u32 %v765, %v769
        %v772 = vshrl.u32 %v753, 16
        %v774 = vshll.u32 %v753, 16
        %v776 = vrot.slane %v774, 1
        %v777 = vor.u32 %v772, %v776
        %v779 = vshrl.u32 %v754, 16
        %v781 = vshll.u32 %v754, 16
        %v783 = vrot.slane %v781, 1
        %v784 = vor.u32 %v779, %v783
        %v786 = vshrl.u32 %v755, 16
        %v788 = vshll.u32 %v755, 16
        %v790 = vrot.slane %v788, 1
        %v791 = vor.u32 %v786, %v790
        %v793 = vshrl.u32 %v756, 16
        %v795 = vshll.u32 %v756, 16
        %v797 = vrot.slane %v795, 1
        %v798 = vor.u32 %v793, %v797
        %799 = vrot.lane.b32.xlu0 %v763, 20
        %v800 = vpop.permute.xlu0 %799
        %801 = vrot.lane.b32.xlu0 %v770, 20
        %v802 = vpop.permute.xlu0 %801
        %803 = vrot.lane.b32.xlu0 %v777, 20
        %v804 = vpop.permute.xlu0 %803
        %805 = vrot.lane.b32.xlu0 %v784, 20
        %v806 = vpop.permute.xlu0 %805
        %807 = vrot.lane.b32.xlu0 %v791, 20
        %v808 = vpop.permute.xlu0 %807
        %809 = vrot.lane.b32.xlu0 %v798, 20
        %v810 = vpop.permute.xlu0 %809
        %817 = vst.msk [vmem:[%s229] sm:$0x3] %vm726, %v800
        %818 = vst.msk [vmem:[%s229 + $0x10] sm:$0x3] %vm726, %v802
        %819 = vst.msk [vmem:[%s229 + $0x20] sm:$0x3] %vm726, %v804
        %820 = vst.msk [vmem:[%s229 + $0x30] sm:$0x3] %vm726, %v806
        %821 = vst.msk [vmem:[%s229 + $0x40] sm:$0x3] %vm726, %v808
        %822 = vst.msk [vmem:[%s229 + $0x50] sm:$0x3] %vm726, %v810
        %s823 = sadd.s32 %s204, 1
        %s824 = smul.addr %s823, 4
        %s825 = scalar_lea.vmem %s155, %s824
        %v826 = vld [vmem:[%s825] sm:$0x3]
        %v827 = vld [vmem:[%s825 + $0x4] sm:$0x3]
        %v828 = vld [vmem:[%s825 + $0x8] sm:$0x3]
        %v829 = vld [vmem:[%s825 + $0xc] sm:$0x3]
        %v830 = vld [vmem:[%s825 + $0x10] sm:$0x3]
        %v831 = vld [vmem:[%s825 + $0x14] sm:$0x3]
        %v838 = vunpack.c.l.b16 %v826
        %v839 = vunpack.c.l.b16 %v827
        %v840 = vunpack.c.l.b16 %v828
        %v841 = vunpack.c.l.b16 %v829
        %v842 = vunpack.c.l.b16 %v830
        %v843 = vunpack.c.l.b16 %v831
        %v844 = vpack.c.b16 %v838, %v838
        %v845 = vpack.c.b16 %v839, %v839
        %v846 = vpack.c.b16 %v840, %v840
        %v847 = vpack.c.b16 %v841, %v841
        %v848 = vpack.c.b16 %v842, %v842
        %v849 = vpack.c.b16 %v843, %v843
        %850 = vrot.lane.b32.xlu0 %v844, 24
        %v851 = vpop.permute.xlu0 %850
        %852 = vrot.lane.b32.xlu0 %v845, 24
        %v853 = vpop.permute.xlu0 %852
        %854 = vrot.lane.b32.xlu0 %v846, 24
        %v855 = vpop.permute.xlu0 %854
        %856 = vrot.lane.b32.xlu0 %v847, 24
        %v857 = vpop.permute.xlu0 %856
        %858 = vrot.lane.b32.xlu0 %v848, 24
        %v859 = vpop.permute.xlu0 %858
        %860 = vrot.lane.b32.xlu0 %v849, 24
        %v861 = vpop.permute.xlu0 %860
        %vm868 = vcmask 222400
        %869 = vst.msk [vmem:[#allocation2] sm:$0x3] %vm868, %v851
        %870 = vst.msk [vmem:[#allocation2 + $0x10] sm:$0x3] %vm868, %v853
        %871 = vst.msk [vmem:[#allocation2 + $0x20] sm:$0x3] %vm868, %v855
        %872 = vst.msk [vmem:[#allocation2 + $0x30] sm:$0x3] %vm868, %v857
        %873 = vst.msk [vmem:[#allocation2 + $0x40] sm:$0x3] %vm868, %v859
        %874 = vst.msk [vmem:[#allocation2 + $0x50] sm:$0x3] %vm868, %v861
        %s875 = sadd.s32 %s823, 22
        %s876 = smul.addr %s875, 4
        %s877 = scalar_lea.vmem %s155, %s876
        %v878 = vld [vmem:[%s877] sm:$0x3]
        %v879 = vld [vmem:[%s877 + $0x4] sm:$0x3]
        %v880 = vld [vmem:[%s877 + $0x8] sm:$0x3]
        %v881 = vld [vmem:[%s877 + $0xc] sm:$0x3]
        %v882 = vld [vmem:[%s877 + $0x10] sm:$0x3]
        %v883 = vld [vmem:[%s877 + $0x14] sm:$0x3]
        %v890 = vunpack.c.l.b16 %v878
        %v891 = vunpack.c.l.b16 %v879
        %v892 = vunpack.c.l.b16 %v880
        %v893 = vunpack.c.l.b16 %v881
        %v894 = vunpack.c.l.b16 %v882
        %v895 = vunpack.c.l.b16 %v883
        %v896 = vpack.c.b16 %v890, %v890
        %v897 = vpack.c.b16 %v891, %v891
        %v898 = vpack.c.b16 %v892, %v892
        %v899 = vpack.c.b16 %v893, %v893
        %v900 = vpack.c.b16 %v894, %v894
        %v901 = vpack.c.b16 %v895, %v895
        %902 = vrot.lane.b32.xlu0 %v896, 24
        %v903 = vpop.permute.xlu0 %902
        %904 = vrot.lane.b32.xlu0 %v897, 24
        %v905 = vpop.permute.xlu0 %904
        %906 = vrot.lane.b32.xlu0 %v898, 24
        %v907 = vpop.permute.xlu0 %906
        %908 = vrot.lane.b32.xlu0 %v899, 24
        %v909 = vpop.permute.xlu0 %908
        %910 = vrot.lane.b32.xlu0 %v900, 24
        %v911 = vpop.permute.xlu0 %910
        %912 = vrot.lane.b32.xlu0 %v901, 24
        %v913 = vpop.permute.xlu0 %912
        %920 = vst.msk [vmem:[%s229] sm:$0x3] %vm868, %v903
        %921 = vst.msk [vmem:[%s229 + $0x10] sm:$0x3] %vm868, %v905
        %922 = vst.msk [vmem:[%s229 + $0x20] sm:$0x3] %vm868, %v907
        %923 = vst.msk [vmem:[%s229 + $0x30] sm:$0x3] %vm868, %v909
        %924 = vst.msk [vmem:[%s229 + $0x40] sm:$0x3] %vm868, %v911
        %925 = vst.msk [vmem:[%s229 + $0x50] sm:$0x3] %vm868, %v913
        %s926 = sadd.s32 %s823, 11
        %s927 = smul.addr %s926, 4
        %s928 = scalar_lea.vmem %s155, %s927
        %v929 = vld [vmem:[%s928] sm:$0x3]
        %v930 = vld [vmem:[%s928 + $0x4] sm:$0x3]
        %v931 = vld [vmem:[%s928 + $0x8] sm:$0x3]
        %v932 = vld [vmem:[%s928 + $0xc] sm:$0x3]
        %v933 = vld [vmem:[%s928 + $0x10] sm:$0x3]
        %v934 = vld [vmem:[%s928 + $0x14] sm:$0x3]
        %v941 = vunpack.c.l.b16 %v929
        %v942 = vunpack.c.l.b16 %v930
        %v943 = vunpack.c.l.b16 %v931
        %v944 = vunpack.c.l.b16 %v932
        %v945 = vunpack.c.l.b16 %v933
        %v946 = vunpack.c.l.b16 %v934
        %v947 = vpack.c.b16 %v941, %v941
        %v948 = vpack.c.b16 %v942, %v942
        %v949 = vpack.c.b16 %v943, %v943
        %v950 = vpack.c.b16 %v944, %v944
        %v951 = vpack.c.b16 %v945, %v945
        %v952 = vpack.c.b16 %v946, %v946
        %953 = vrot.lane.b32.xlu0 %v947, 28
        %v954 = vpop.permute.xlu0 %953
        %955 = vrot.lane.b32.xlu0 %v948, 28
        %v956 = vpop.permute.xlu0 %955
        %957 = vrot.lane.b32.xlu0 %v949, 28
        %v958 = vpop.permute.xlu0 %957
        %959 = vrot.lane.b32.xlu0 %v950, 28
        %v960 = vpop.permute.xlu0 %959
        %961 = vrot.lane.b32.xlu0 %v951, 28
        %v962 = vpop.permute.xlu0 %961
        %963 = vrot.lane.b32.xlu0 %v952, 28
        %v964 = vpop.permute.xlu0 %963
        %vm971 = vcmask 255200
        %972 = vst.msk [vmem:[#allocation2] sm:$0x3] %vm971, %v954
        %973 = vst.msk [vmem:[#allocation2 + $0x10] sm:$0x3] %vm971, %v956
        %974 = vst.msk [vmem:[#allocation2 + $0x20] sm:$0x3] %vm971, %v958
        %975 = vst.msk [vmem:[#allocation2 + $0x30] sm:$0x3] %vm971, %v960
        %976 = vst.msk [vmem:[#allocation2 + $0x40] sm:$0x3] %vm971, %v962
        %977 = vst.msk [vmem:[#allocation2 + $0x50] sm:$0x3] %vm971, %v964
        %s978 = sadd.s32 %s823, 33
        %s979 = smul.addr %s978, 4
        %s980 = scalar_lea.vmem %s155, %s979
        %v981 = vld [vmem:[%s980] sm:$0x3]
        %v982 = vld [vmem:[%s980 + $0x4] sm:$0x3]
        %v983 = vld [vmem:[%s980 + $0x8] sm:$0x3]
        %v984 = vld [vmem:[%s980 + $0xc] sm:$0x3]
        %v985 = vld [vmem:[%s980 + $0x10] sm:$0x3]
        %v986 = vld [vmem:[%s980 + $0x14] sm:$0x3]
        %v993 = vunpack.c.l.b16 %v981
        %v994 = vunpack.c.l.b16 %v982
        %v995 = vunpack.c.l.b16 %v983
        %v996 = vunpack.c.l.b16 %v984
        %v997 = vunpack.c.l.b16 %v985
        %v998 = vunpack.c.l.b16 %v986
        %v999 = vpack.c.b16 %v993, %v993
        %v1000 = vpack.c.b16 %v994, %v994
        %v1001 = vpack.c.b16 %v995, %v995
        %v1002 = vpack.c.b16 %v996, %v996
        %v1003 = vpack.c.b16 %v997, %v997
        %v1004 = vpack.c.b16 %v998, %v998
        %1005 = vrot.lane.b32.xlu0 %v999, 28
        %v1006 = vpop.permute.xlu0 %1005
        %1007 = vrot.lane.b32.xlu0 %v1000, 28
        %v1008 = vpop.permute.xlu0 %1007
        %1009 = vrot.lane.b32.xlu0 %v1001, 28
        %v1010 = vpop.permute.xlu0 %1009
        %1011 = vrot.lane.b32.xlu0 %v1002, 28
        %v1012 = vpop.permute.xlu0 %1011
        %1013 = vrot.lane.b32.xlu0 %v1003, 28
        %v1014 = vpop.permute.xlu0 %1013
        %1015 = vrot.lane.b32.xlu0 %v1004, 28
        %v1016 = vpop.permute.xlu0 %1015
        %1023 = vst.msk [vmem:[%s229] sm:$0x3] %vm971, %v1006
        %1024 = vst.msk [vmem:[%s229 + $0x10] sm:$0x3] %vm971, %v1008
        %1025 = vst.msk [vmem:[%s229 + $0x20] sm:$0x3] %vm971, %v1010
        %1026 = vst.msk [vmem:[%s229 + $0x30] sm:$0x3] %vm971, %v1012
        %1027 = vst.msk [vmem:[%s229 + $0x40] sm:$0x3] %vm971, %v1014
        %1028 = vst.msk [vmem:[%s229 + $0x50] sm:$0x3] %vm971, %v1016
        %v1029 = vld [vmem:[%s877] sm:$0x3]
        %v1030 = vld [vmem:[%s877 + $0x4] sm:$0x3]
        %v1031 = vld [vmem:[%s877 + $0x8] sm:$0x3]
        %v1032 = vld [vmem:[%s877 + $0xc] sm:$0x3]
        %v1033 = vld [vmem:[%s877 + $0x10] sm:$0x3]
        %v1034 = vld [vmem:[%s877 + $0x14] sm:$0x3]
        %v1041 = vunpack.c.l.b16 %v1029
        %v1042 = vunpack.c.l.b16 %v1030
        %v1043 = vunpack.c.l.b16 %v1031
        %v1044 = vunpack.c.l.b16 %v1032
        %v1045 = vunpack.c.l.b16 %v1033
        %v1046 = vunpack.c.l.b16 %v1034
        %v1047 = vpack.c.b16 %v1041, %v1041
        %v1048 = vpack.c.b16 %v1042, %v1042
        %v1049 = vpack.c.b16 %v1043, %v1043
        %v1050 = vpack.c.b16 %v1044, %v1044
        %v1051 = vpack.c.b16 %v1045, %v1045
        %v1052 = vpack.c.b16 %v1046, %v1046
        %1053 = vrot.lane.b32.xlu0 %v1047, 32
        %v1054 = vpop.permute.xlu0 %1053
        %1055 = vrot.lane.b32.xlu0 %v1048, 32
        %v1056 = vpop.permute.xlu0 %1055
        %1057 = vrot.lane.b32.xlu0 %v1049, 32
        %v1058 = vpop.permute.xlu0 %1057
        %1059 = vrot.lane.b32.xlu0 %v1050, 32
        %v1060 = vpop.permute.xlu0 %1059
        %1061 = vrot.lane.b32.xlu0 %v1051, 32
        %v1062 = vpop.permute.xlu0 %1061
        %1063 = vrot.lane.b32.xlu0 %v1052, 32
        %v1064 = vpop.permute.xlu0 %1063
        %vm1071 = vcmask 288000
        %1072 = vst.msk [vmem:[#allocation2] sm:$0x3] %vm1071, %v1054
        %1073 = vst.msk [vmem:[#allocation2 + $0x10] sm:$0x3] %vm1071, %v1056
        %1074 = vst.msk [vmem:[#allocation2 + $0x20] sm:$0x3] %vm1071, %v1058
        %1075 = vst.msk [vmem:[#allocation2 + $0x30] sm:$0x3] %vm1071, %v1060
        %1076 = vst.msk [vmem:[#allocation2 + $0x40] sm:$0x3] %vm1071, %v1062
        %1077 = vst.msk [vmem:[#allocation2 + $0x50] sm:$0x3] %vm1071, %v1064
        %v1078 = vld [vmem:[%s825] sm:$0x7]
        %v1079 = vld [vmem:[%s825 + $0x4] sm:$0x7]
        %v1080 = vld [vmem:[%s825 + $0x8] sm:$0x7]
        %v1081 = vld [vmem:[%s825 + $0xc] sm:$0x7]
        %v1082 = vld [vmem:[%s825 + $0x10] sm:$0x7]
        %v1083 = vld [vmem:[%s825 + $0x14] sm:$0x7]
        %v1090 = vunpack.c.l.b16 %v1078
        %v1091 = vunpack.c.l.b16 %v1079
        %v1092 = vunpack.c.l.b16 %v1080
        %v1093 = vunpack.c.l.b16 %v1081
        %v1094 = vunpack.c.l.b16 %v1082
        %v1095 = vunpack.c.l.b16 %v1083
        %v1096 = vpack.c.b16 %v1090, %v1090
        %v1097 = vpack.c.b16 %v1091, %v1091
        %v1098 = vpack.c.b16 %v1092, %v1092
        %v1099 = vpack.c.b16 %v1093, %v1093
        %v1100 = vpack.c.b16 %v1094, %v1094
        %v1101 = vpack.c.b16 %v1095, %v1095
        %v1103 = vshrl.u32 %v1096, 16
        %v1105 = vshll.u32 %v1096, 16
        %v1107 = vrot.slane %v1105, 1
        %v1108 = vor.u32 %v1103, %v1107
        %v1110 = vshrl.u32 %v1097, 16
        %v1112 = vshll.u32 %v1097, 16
        %v1114 = vrot.slane %v1112, 1
        %v1115 = vor.u32 %v1110, %v1114
        %v1117 = vshrl.u32 %v1098, 16
        %v1119 = vshll.u32 %v1098, 16
        %v1121 = vrot.slane %v1119, 1
        %v1122 = vor.u32 %v1117, %v1121
        %v1124 = vshrl.u32 %v1099, 16
        %v1126 = vshll.u32 %v1099, 16
        %v1128 = vrot.slane %v1126, 1
        %v1129 = vor.u32 %v1124, %v1128
        %v1131 = vshrl.u32 %v1100, 16
        %v1133 = vshll.u32 %v1100, 16
        %v1135 = vrot.slane %v1133, 1
        %v1136 = vor.u32 %v1131, %v1135
        %v1138 = vshrl.u32 %v1101, 16
        %v1140 = vshll.u32 %v1101, 16
        %v1142 = vrot.slane %v1140, 1
        %v1143 = vor.u32 %v1138, %v1142
        %1144 = vrot.lane.b32.xlu0 %v1108, 32
        %v1145 = vpop.permute.xlu0 %1144
        %1146 = vrot.lane.b32.xlu0 %v1115, 32
        %v1147 = vpop.permute.xlu0 %1146
        %1148 = vrot.lane.b32.xlu0 %v1122, 32
        %v1149 = vpop.permute.xlu0 %1148
        %1150 = vrot.lane.b32.xlu0 %v1129, 32
        %v1151 = vpop.permute.xlu0 %1150
        %1152 = vrot.lane.b32.xlu0 %v1136, 32
        %v1153 = vpop.permute.xlu0 %1152
        %1154 = vrot.lane.b32.xlu0 %v1143, 32
        %v1155 = vpop.permute.xlu0 %1154
        %1162 = vst.msk [vmem:[%s229] sm:$0x3] %vm1071, %v1145
        %1163 = vst.msk [vmem:[%s229 + $0x10] sm:$0x3] %vm1071, %v1147
        %1164 = vst.msk [vmem:[%s229 + $0x20] sm:$0x3] %vm1071, %v1149
        %1165 = vst.msk [vmem:[%s229 + $0x30] sm:$0x3] %vm1071, %v1151
        %1166 = vst.msk [vmem:[%s229 + $0x40] sm:$0x3] %vm1071, %v1153
        %1167 = vst.msk [vmem:[%s229 + $0x50] sm:$0x3] %vm1071, %v1155
        // Predicated region
        $region33: #{tpu_custom_call.1} parent=27 // pred_check
          %p1168 = pneg %p159
        $region34: #{tpu_custom_call.1} parent=27 // pred_check_branch
          %1170 = sbr.rel (%p1168) target = $region36
        $region35: #{tpu_custom_call.1} parent=27 // pred_region
          %vm1171 = vcmask 302080
          %1172 = vst.msk [vmem:[#allocation2] sm:$0xff] %vm1171, 0
          %1173 = vst.msk [vmem:[#allocation2 + $0x8] sm:$0xff] %vm1171, 0
        $region36: #{tpu_custom_call.1} parent=27 // pred_fallthru
          _
        %v1174 = vld [vmem:[#allocation2] sm:$0xff]
        %v1175 = vld [vmem:[#allocation2 + $0x8] sm:$0xff]
        %v1176 = vld [vmem:[#allocation2 + $0x10] sm:$0xff]
        %v1177 = vld [vmem:[#allocation2 + $0x18] sm:$0xff]
        %v1178 = vld [vmem:[#allocation2 + $0x20] sm:$0xff]
        %v1179 = vld [vmem:[#allocation2 + $0x28] sm:$0xff]
        %v1180 = vld [vmem:[#allocation2 + $0x30] sm:$0xff]
        %v1181 = vld [vmem:[#allocation2 + $0x38] sm:$0xff]
        %v1182 = vld [vmem:[#allocation2 + $0x40] sm:$0xff]
        %v1183 = vld [vmem:[#allocation2 + $0x48] sm:$0xff]
        %v1184 = vld [vmem:[#allocation2 + $0x50] sm:$0xff]
        %v1185 = vld [vmem:[#allocation2 + $0x58] sm:$0xff]
        %v1186 = vld [vmem:[%s1] sm:$0xf]
        %v1187 = vld [vmem:[%s1 + $0x4] sm:$0xf]
        %v1188 = vld [vmem:[%s1 + $0x8] sm:$0xf]
        %v1189 = vld [vmem:[%s1 + $0xc] sm:$0xf]
        %v1190 = vld [vmem:[%s1 + $0x10] sm:$0x7]
        %v1196 = vunpack.c.l.b16 %v1186
        %v1197 = vunpack.c.l.b16 %v1187
        %v1198 = vunpack.c.l.b16 %v1188
        %v1199 = vunpack.c.l.b16 %v1189
        %v1200 = vunpack.c.l.b16 %v1190
        %v1201 = vpack.c.b16 %v1197, %v1196
        %v1202 = vpack.c.b16 %v1199, %v1198
        %v1203 = vpack.c.b16 %v1200, %v1200
        %vm1206 = vcmask 302080
        %v1208 = vsel %vm1206, %v1174, 0
        %v1211 = vsel %vm1206, %v1175, 0
        %v1214 = vsel %vm1206, %v1176, 0
        %v1217 = vsel %vm1206, %v1177, 0
        %v1220 = vsel %vm1206, %v1178, 0
        %v1223 = vsel %vm1206, %v1179, 0
        %v1226 = vsel %vm1206, %v1180, 0
        %v1229 = vsel %vm1206, %v1181, 0
        %v1232 = vsel %vm1206, %v1182, 0
        %v1235 = vsel %vm1206, %v1183, 0
        %v1238 = vsel %vm1206, %v1184, 0
        %v1241 = vsel %vm1206, %v1185, 0
        %vm1243 = vcmask 1041408
        %vm1244 = vcmask 1042432
        %v1245 = vsel %vm1243, 4294967295, 65535
        %v1246 = vsel %vm1244, %v1245, 0
        %v1248 = vand.u32 %v1203, %v1246
        %1250 = vmatprep.subr.bf16.mxu0 0
        %1251 = vmatpush1.bf16.msra.mxu0 %v1201
        %1252 = vmatprep.subr.bf16.mxu0 0
        %1253 = vmatpush1.bf16.msra.mxu0 %v1202
        %1254 = vmatprep.subr.bf16.mxu0 0
        %1255 = vmatpush1.bf16.msra.mxu0 %v1248
        %1256 = vmatprep.subr.bf16.mxu0 0
        %1257 = vmatpush1.bf16.msra.mxu0 0
        %1258 = vmatprep.subr.bf16.mxu0 0
        %1259 = vmatpush1.bf16.msra.mxu0 0
        %1260 = vmatprep.subr.bf16.mxu0 0
        %1261 = vmatpush1.bf16.msra.mxu0 0
        %1262 = vmatprep.subr.bf16.mxu0 0
        %1263 = vmatpush1.bf16.msra.mxu0 0
        %1264 = vmatprep.subr.bf16.mxu0 0
        %1265 = vmatpush1.bf16.msra.mxu0 0
        %1266 = vmatprep.subr.bf16.mxu0 0
        %1267 = vmatpush1.bf16.msra.mxu0 0
        %1268 = vmatprep.subr.bf16.mxu0 0
        %1269 = vmatpush1.bf16.msra.mxu0 0
        %1270 = vmatprep.subr.bf16.mxu0 0
        %1271 = vmatpush1.bf16.msra.mxu0 0
        %1272 = vmatprep.subr.bf16.mxu0 0
        %1273 = vmatpush1.bf16.msra.mxu0 0
        %1274 = vmatprep.subr.bf16.mxu0 0
        %1275 = vmatpush1.bf16.msra.mxu0 0
        %1276 = vmatprep.subr.bf16.mxu0 0
        %1277 = vmatpush1.bf16.msra.mxu0 0
        %1278 = vmatprep.subr.bf16.mxu0 0
        %1279 = vmatpush1.bf16.msra.mxu0 0
        %1280 = vmatprep.subr.bf16.mxu0 0
        %1281 = vmatpush1.bf16.msra.mxu0 0
        %1282 = vmatprep.mubr.bf16.mxu0 0
        %1283 = vmatmul.mubr.bf16.gmra.mrb[0].mxu0 %v1208
        %v1284 = vpop.f32.mrb[0].mxu0
        %v1285 = vadd.f32 0.0, %v1284
        %v1286 = vpop.f32.mrb[0].mxu0
        %v1287 = vpop.f32.mrb[0].mxu0
        %v1288 = vpop.f32.mrb[0].mxu0
        %1289 = vmatprep.mubr.bf16.mxu0 0
        %1290 = vmatmul.mubr.bf16.gmra.mrb[0].mxu0 %v1211
        %v1291 = vpop.f32.mrb[0].mxu0
        %v1292 = vadd.f32 0.0, %v1291
        %v1293 = vpop.f32.mrb[0].mxu0
        %v1294 = vpop.f32.mrb[0].mxu0
        %v1295 = vpop.f32.mrb[0].mxu0
        %1296 = vmatprep.mubr.bf16.mxu0 0
        %1297 = vmatmul.mubr.bf16.gmra.mrb[0].mxu0 %v1214
        %v1298 = vpop.f32.mrb[0].mxu0
        %v1299 = vadd.f32 0.0, %v1298
        %v1300 = vpop.f32.mrb[0].mxu0
        %v1301 = vpop.f32.mrb[0].mxu0
        %v1302 = vpop.f32.mrb[0].mxu0
        %1303 = vmatprep.mubr.bf16.mxu0 0
        %1304 = vmatmul.mubr.bf16.gmra.mrb[0].mxu0 %v1217
        %v1305 = vpop.f32.mrb[0].mxu0
        %v1306 = vadd.f32 0.0, %v1305
        %v1307 = vpop.f32.mrb[0].mxu0
        %v1308 = vpop.f32.mrb[0].mxu0
        %v1309 = vpop.f32.mrb[0].mxu0
        %1310 = vmatprep.mubr.bf16.mxu0 0
        %1311 = vmatmul.mubr.bf16.gmra.mrb[0].mxu0 %v1220
        %v1312 = vpop.f32.mrb[0].mxu0
        %v1313 = vadd.f32 0.0, %v1312
        %v1314 = vpop.f32.mrb[0].mxu0
        %v1315 = vpop.f32.mrb[0].mxu0
        %v1316 = vpop.f32.mrb[0].mxu0
        %1317 = vmatprep.mubr.bf16.mxu0 0
        %1318 = vmatmul.mubr.bf16.gmra.mrb[0].mxu0 %v1223
        %v1319 = vpop.f32.mrb[0].mxu0
        %v1320 = vadd.f32 0.0, %v1319
        %v1321 = vpop.f32.mrb[0].mxu0
        %v1322 = vpop.f32.mrb[0].mxu0
        %v1323 = vpop.f32.mrb[0].mxu0
        %1324 = vmatprep.mubr.bf16.mxu0 0
        %1325 = vmatmul.mubr.bf16.gmra.mrb[0].mxu0 %v1226
        %v1326 = vpop.f32.mrb[0].mxu0
        %v1327 = vadd.f32 0.0, %v1326
        %v1328 = vpop.f32.mrb[0].mxu0
        %v1329 = vpop.f32.mrb[0].mxu0
        %v1330 = vpop.f32.mrb[0].mxu0
        %1331 = vmatprep.mubr.bf16.mxu0 0
        %1332 = vmatmul.mubr.bf16.gmra.mrb[0].mxu0 %v1229
        %v1333 = vpop.f32.mrb[0].mxu0
        %v1334 = vadd.f32 0.0, %v1333
        %v1335 = vpop.f32.mrb[0].mxu0
        %v1336 = vpop.f32.mrb[0].mxu0
        %v1337 = vpop.f32.mrb[0].mxu0
        %1338 = vmatprep.mubr.bf16.mxu0 0
        %1339 = vmatmul.mubr.bf16.gmra.mrb[0].mxu0 %v1232
        %v1340 = vpop.f32.mrb[0].mxu0
        %v1341 = vadd.f32 0.0, %v1340
        %v1342 = vpop.f32.mrb[0].mxu0
        %v1343 = vpop.f32.mrb[0].mxu0
        %v1344 = vpop.f32.mrb[0].mxu0
        %1345 = vmatprep.mubr.bf16.mxu0 0
        %1346 = vmatmul.mubr.bf16.gmra.mrb[0].mxu0 %v1235
        %v1347 = vpop.f32.mrb[0].mxu0
        %v1348 = vadd.f32 0.0, %v1347
        %v1349 = vpop.f32.mrb[0].mxu0
        %v1350 = vpop.f32.mrb[0].mxu0
        %v1351 = vpop.f32.mrb[0].mxu0
        %1352 = vmatprep.mubr.bf16.mxu0 0
        %1353 = vmatmul.mubr.bf16.gmra.mrb[0].mxu0 %v1238
        %v1354 = vpop.f32.mrb[0].mxu0
        %v1355 = vpop.f32.mrb[0].mxu0
        %v1356 = vpop.f32.mrb[0].mxu0
        %v1357 = vpop.f32.mrb[0].mxu0
        %1358 = vmatprep.mubr.bf16.mxu0 0
        %1359 = vmatmul.mubr.bf16.gmra.mrb[0].mxu0 %v1241
        %v1360 = vpop.f32.mrb[0].mxu0
        %v1361 = vpop.f32.mrb[0].mxu0
        %v1362 = vpop.f32.mrb[0].mxu0
        %v1363 = vpop.f32.mrb[0].mxu0
        %1364 = vdwg.mxu0
        %v1365 = vmax.f32 %v1285, 0.0
        %v1366 = vmax.f32 %v1292, 0.0
        %v1367 = vmax.f32 %v1299, 0.0
        %v1368 = vmax.f32 %v1306, 0.0
        %v1369 = vmax.f32 %v1313, 0.0
        %v1370 = vmax.f32 %v1320, 0.0
        %v1371 = vmax.f32 %v1327, 0.0
        %v1372 = vmax.f32 %v1334, 0.0
        %v1373 = vmax.f32 %v1341, 0.0
        %v1374 = vmax.f32 %v1348, 0.0
        %v1375 = vmax.f32 %v1365, %v1367
        %v1376 = vmax.f32 %v1369, %v1371
        %v1377 = vmax.f32 %v1375, %v1369
        %v1378 = vmax.f32 %v1376, %v1373
        %v1379 = vmax.f32 %v1366, %v1368
        %v1380 = vmax.f32 %v1370, %v1372
        %v1381 = vmax.f32 %v1379, %v1370
        %v1382 = vmax.f32 %v1380, %v1374
        %v1383 = vmax.f32 %v1377, %v1381
        %v1384 = vmax.f32 %v1378, %v1382
        %1385 = vst [vmem:[%s150] sm:$0x1] %v1383
        %1386 = vst [vmem:[%s150 + $0x4] sm:$0x1] %v1384
        %v1389 = vrot.slane %v1381, 7
        %v1390 = vrot.slane %v1382, 7
        %v1393 = vmax.f32 %v1383, %v1389
        %v1394 = vmax.f32 %v1384, %v1390
        %1395 = vst [vmem:[%s150] sm:$0xe] %v1393
        %1396 = vst [vmem:[%s150 + $0x4] sm:$0xe] %v1394
        %s1397 = sand.u32 %s85, 1
        %s1398 = scalar_lea.sflag [#allocation4], %s1397
        %s1399 = sand.u32 %s85, 1
        %s1400 = smul.addr %s1399, 8
        %s1401 = scalar_lea.vmem [#allocation3], %s1400
        // Predicated region
        $region37: #{tpu_custom_call.1} parent=27 // pred_check
          %p1402 = pneg %p95
        $region38: #{tpu_custom_call.1} parent=27 // pred_check_branch
          %1404 = sbr.rel (%p1402) target = $region40
        $region39: #{tpu_custom_call.1} parent=27 // pred_region
          %s1405 = smul.u32 2, %s21
          %s1407 = ssub.s32 128, 128
          %1408 = vsyncadd %s1398, %s1407
          %s1409 = smul.addr %s20, 4
          %s1410 = sadd.s32 %s1405, %s1409
          %s1411 = smul.addr %s1410, 64
          %s1412 = scalar_lea.hbm %s2, %s1411
          %s1413 = sshll.u32 %s1401, 4
          %s1414 = int_to_ptr.vmem [resolvable:$true] %s1413
          %1419 = dma.vmem_to_hbm [thread:$0]  %s1414, 128, %s1412, %s1398, 64, 64, 4
        $region40: #{tpu_custom_call.1} parent=27 // pred_fallthru
          _
      $region28: #{tpu_custom_call.1} parent=5 // pred_fallthru
        _
      %p1420 = scmp.le.s32.totalorder 2, %s11
      // Predicated region
      $region41: #{tpu_custom_call.1} parent=5 // pred_check
        %p1421 = pneg %p1420
      $region42: #{tpu_custom_call.1} parent=5 // pred_check_branch
        %1423 = sbr.rel (%p1421) target = $region44
      $region43: #{tpu_custom_call.1} parent=5 // pred_region
        %s1424 = ssub.s32 %s11, 2
        // Predicated region
        $region45: #{tpu_custom_call.1} parent=43 // pred_check
          %p1425 = pneg %p101
        $region46: #{tpu_custom_call.1} parent=43 // pred_check_branch
          %1427 = sbr.rel (%p1425) target = $region48
        $region47: #{tpu_custom_call.1} parent=43 // pred_region
          %s1428 = sand.u32 %s86, 1
          %s1429 = scalar_lea.sflag [#allocation4], %s1428
          %s1430 = sand.u32 %s86, 1
          %s1431 = smul.addr %s1430, 8
          %s1432 = scalar_lea.vmem [#allocation3], %s1431
          %1433 = dma.done %s1429, 128
        $region48: #{tpu_custom_call.1} parent=43 // pred_fallthru
          _
      $region44: #{tpu_custom_call.1} parent=5 // pred_fallthru
        _
    $region6: #{tpu_custom_call.1} parent=1 // loop_footer
      %s15 = sadd.s32 1, %s11
    $region7: #{tpu_custom_call.1} parent=1 // loop_footer_branch
      %10 = sbr.rel target = $region3
    $region8: #{tpu_custom_call.1} parent=1 // loop_exit
      _
    %1434 = vsyncpa [#allocation4], 1
    %s1435 = scalar_lea.sflag [#allocation4], 1
    %1436 = vsyncpa %s1435, 1

</llo_original>
